<compile_context>
chip_gen: v7x
topology: tpu7x:2x2x1
jax: 0.10.0
libtpu: 0.0.40
codegen_flags: <defaults>
</compile_context>

<pallas_src>
import functools

import jax
import jax.numpy as jnp
import numpy as np
from jax import lax
from jax.experimental import pallas as pl
from jax.experimental.pallas import tpu as pltpu

EPS = 1e-5                       # PyTorch BatchNorm1d default eps
_LANE = 128
_VMEM_LIMIT_BYTES = 32 * 1024 * 1024   # fits scoped-VMEM defaults on v5e/v6e/v7x


def _round_up(x, m):
    return ((x + m - 1) // m) * m


def _auto_batch_tile(n, lpad, l_out, cp_in, cp_out):
    """Largest divisor of n whose per-step VMEM footprint fits a conservative budget."""
    per_sample = 4 * (2 * lpad * cp_in        # double-buffered input block
                      + 2 * l_out * cp_out    # double-buffered output block
                      + 3 * l_out * cp_in     # im2col columns
                      + l_out * cp_out)       # matmul result
    budget = 8 * 1024 * 1024
    for cand in range(n, 0, -1):
        if n % cand == 0 and cand * per_sample <= budget:
            return cand
    return 1


# ------------------------------ in-kernel helpers ------------------------------

def _matmul_and_stats(cols, w_ref, y_ref, st_ref, mm_dtype):
    """cols: (TB, Lout, K*Cp_in). One MXU matmul (M = TB*Lout) + per-tile BN stats."""
    tb, lo, kc = cols.shape
    c_out = w_ref.shape[-1]
    a = cols.reshape(tb * lo, kc).astype(mm_dtype)
    b = w_ref[...].astype(mm_dtype)
    y = jnp.dot(a, b, preferred_element_type=jnp.float32)          # (TB*Lout, Cp_out) f32
    y_ref[...] = y.reshape(tb, lo, c_out).astype(y_ref.dtype)
    # Partial BN statistics for this batch tile (sum, sum of squares per channel).
    # NOTE: single-pass E[x^2]-E[x]^2 form; accumulated in f32 which is ample for
    # activation-scale values (see wrapper where the affine is folded).
    s0 = jnp.sum(y, axis=0, keepdims=True)                          # (1, Cp_out)
    s1 = jnp.sum(y * y, axis=0, keepdims=True)                      # (1, Cp_out)
    st_ref[...] = jnp.concatenate(
        [s0, s1, jnp.zeros((6, c_out), jnp.float32)], axis=0)[None]  # (1, 8, Cp_out)


def _conv_stats_kernel(x_ref, w_ref, y_ref, st_ref, *, tap_starts, stride, l_out, mm_dtype):
    """Strided conv from an L-haloed input block (conv1 and the 1x1 shortcut conv)."""
    taps = []
    for s0 in tap_starts:
        if stride == 1:
            taps.append(x_ref[:, pl.ds(s0, l_out), :])
        else:
            taps.append(x_ref[:, pl.ds(s0, l_out, stride), :])       # strided sublane load
    cols = taps[0] if len(taps) == 1 else jnp.concatenate(taps, axis=-1)
    _matmul_and_stats(cols, w_ref, y_ref, st_ref, mm_dtype)


def _bn_relu_conv_stats_kernel(y_in_ref, scale_ref, shift_ref, w_ref, y_ref, st_ref, *,
                               mm_dtype):
    """Fused bn1 + ReLU + conv2 (k=3, stride 1). Taps built by sublane shifts of the
    normalized activation so the zero padding stays exactly zero."""
    h = jnp.maximum(y_in_ref[...] * scale_ref[...] + shift_ref[...], 0.0)
    tb, l, cp = h.shape
    zrow = jnp.zeros((tb, 1, cp), h.dtype)
    left = jnp.concatenate([zrow, h[:, :l - 1, :]], axis=1)          # tap offset -1
    right = jnp.concatenate([h[:, 1:, :], zrow], axis=1)             # tap offset +1
    cols = jnp.concatenate([left, h, right], axis=-1)                # (TB, L, 3*Cp)
    _matmul_and_stats(cols, w_ref, y_ref, st_ref, mm_dtype)


def _bn_add_relu_kernel(y_ref, sc_ref, s2_ref, h2_ref, ssc_ref, hsc_ref, o_ref):
    """bn2(y2) + (bn_sc(shortcut) or identity) -> ReLU, one lane-dense store."""
    main = y_ref[...] * s2_ref[...] + h2_ref[...]
    sc = sc_ref[...] * ssc_ref[...] + hsc_ref[...]
    o_ref[...] = jnp.maximum(main + sc, 0.0).astype(o_ref.dtype)


# ------------------------------ pallas_call wrappers ----------------------------

def _compiler_params():
    return pltpu.CompilerParams(dimension_semantics=("parallel",),
                                vmem_limit_bytes=_VMEM_LIMIT_BYTES)


def _conv_stats_call(x_hal, w_flat, *, k, pad, stride, l_out, tb, mm_dtype):
    n, lpad, cp_in = x_hal.shape
    kcp, cp_out = w_flat.shape
    n_tiles = n // tb
    tap_starts = tuple(t - pad + 1 for t in range(k))   # +1: wrapper added a 1-row halo
    kernel = functools.partial(_conv_stats_kernel, tap_starts=tap_starts,
                               stride=stride, l_out=l_out, mm_dtype=mm_dtype)
    y, st = pl.pallas_call(
        kernel,
        grid=(n_tiles,),
        in_specs=[pl.BlockSpec((tb, lpad, cp_in), lambda i: (i, 0, 0)),
                  pl.BlockSpec((kcp, cp_out), lambda i: (0, 0))],
        out_specs=[pl.BlockSpec((tb, l_out, cp_out), lambda i: (i, 0, 0)),
                   pl.BlockSpec((1, 8, cp_out), lambda i: (i, 0, 0))],
        out_shape=[jax.ShapeDtypeStruct((n, l_out, cp_out), jnp.float32),
                   jax.ShapeDtypeStruct((n_tiles, 8, cp_out), jnp.float32)],
        compiler_params=_compiler_params(),
    )(x_hal, w_flat)
    return y, st


def _bn_relu_conv_call(y1, scale1, shift1, w_flat, *, tb, mm_dtype):
    n, lo, cp_in = y1.shape
    kcp, cp_out = w_flat.shape
    n_tiles = n // tb
    kernel = functools.partial(_bn_relu_conv_stats_kernel, mm_dtype=mm_dtype)
    y, st = pl.pallas_call(
        kernel,
        grid=(n_tiles,),
        in_specs=[pl.BlockSpec((tb, lo, cp_in), lambda i: (i, 0, 0)),
                  pl.BlockSpec((1, cp_in), lambda i: (0, 0)),
                  pl.BlockSpec((1, cp_in), lambda i: (0, 0)),
                  pl.BlockSpec((kcp, cp_out), lambda i: (0, 0))],
        out_specs=[pl.BlockSpec((tb, lo, cp_out), lambda i: (i, 0, 0)),
                   pl.BlockSpec((1, 8, cp_out), lambda i: (i, 0, 0))],
        out_shape=[jax.ShapeDtypeStruct((n, lo, cp_out), jnp.float32),
                   jax.ShapeDtypeStruct((n_tiles, 8, cp_out), jnp.float32)],
        compiler_params=_compiler_params(),
    )(y1, scale1, shift1, w_flat)
    return y, st


def _bn_add_relu_call(y2, sc, scale2, shift2, scale_sc, shift_sc, *, tb):
    n, lo, cp = y2.shape
    n_tiles = n // tb
    return pl.pallas_call(
        _bn_add_relu_kernel,
        grid=(n_tiles,),
        in_specs=[pl.BlockSpec((tb, lo, cp), lambda i: (i, 0, 0)),
                  pl.BlockSpec((tb, lo, cp), lambda i: (i, 0, 0)),
                  pl.BlockSpec((1, cp), lambda i: (0, 0)),
                  pl.BlockSpec((1, cp), lambda i: (0, 0)),
                  pl.BlockSpec((1, cp), lambda i: (0, 0)),
                  pl.BlockSpec((1, cp), lambda i: (0, 0))],
        out_specs=pl.BlockSpec((tb, lo, cp), lambda i: (i, 0, 0)),
        out_shape=jax.ShapeDtypeStruct((n, lo, cp), jnp.float32),
        compiler_params=_compiler_params(),
    )(y2, sc, scale2, shift2, scale_sc, shift_sc)


# ------------------------------ host-side glue ----------------------------------

def _flat_w(w, cp_in, cp_out):
    """(K, Cin, Cout) -> zero-pad channels -> (K*Cp_in, Cp_out). Done once."""
    k, ci, co = w.shape
    wp = jnp.pad(w.astype(jnp.float32), ((0, 0), (0, cp_in - ci), (0, cp_out - co)))
    return wp.reshape(k * cp_in, cp_out)


def _affine_from_stats(st_tiles, gamma_p, beta_p, count):
    """Fold batch-mean/var (training-mode, biased) + gamma/beta into scale/shift."""
    s = jnp.sum(st_tiles, axis=0)                      # (8, Cp): row0=sum, row1=sum_sq
    mean = s[0] / count
    var = jnp.maximum(s[1] / count - mean * mean, 0.0)
    inv = lax.rsqrt(var + EPS)
    scale = gamma_p * inv
    shift = beta_p - mean * scale
    return scale.reshape(1, -1), shift.reshape(1, -1)


def residual_block_1d(x_ncl, params, stride, *, mm_dtype=jnp.float32, batch_tile=None):
    """x_ncl: (N, Cin, L) float32 — PyTorch layout. Returns (N, Cout, Lout)."""
    w1, g1, b1, w2, g2, b2, ws, gs, bs = params
    n, c_in, l = x_ncl.shape
    c_out = w1.shape[2]
    has_shortcut = (stride != 1) or (c_in != c_out)

    cp_in = _round_up(c_in, _LANE)
    cp_out = _round_up(c_out, _LANE)
    l_out = (l + 2 * 1 - 3) // stride + 1

    # NLC + lane-dense channel padding (once), plus a 1-row L halo for the k=3/k=1 convs.
    x_nlc = jnp.transpose(x_ncl, (0, 2, 1)).astype(jnp.float32)        # (N, L, Cin)
    x_cp = jnp.pad(x_nlc, ((0, 0), (0, 0), (0, cp_in - c_in)))          # (N, L, Cp_in)
    x_hal = jnp.pad(x_cp, ((0, 0), (1, 1), (0, 0)))                     # (N, L+2, Cp_in)

    # Weights / BN params: padded + flattened once in the wrapper (hoisted).
    w1f = _flat_w(w1, cp_in, cp_out)                 # (3*Cp_in, Cp_out)
    w2f = _flat_w(w2, cp_out, cp_out)                # (3*Cp_out, Cp_out)
    g1p = jnp.pad(g1.reshape(-1), (0, cp_out - c_out))
    b1p = jnp.pad(b1.reshape(-1), (0, cp_out - c_out))
    g2p = jnp.pad(g2.reshape(-1), (0, cp_out - c_out))
    b2p = jnp.pad(b2.reshape(-1), (0, cp_out - c_out))

    tb = batch_tile if batch_tile is not None else _auto_batch_tile(n, l + 2, l_out,
                                                                    cp_in, cp_out)
    assert n % tb == 0, "batch_tile must divide the batch size"
    count = float(n * l_out)

    # conv1 (stride s) + partial BN stats
    y1, st1 = _conv_stats_call(x_hal, w1f, k=3, pad=1, stride=stride,
                               l_out=l_out, tb=tb, mm_dtype=mm_dtype)
    scale1, shift1 = _affine_from_stats(st1, g1p, b1p, count)

    # bn1 + ReLU fused into conv2 (stride 1) + partial BN stats
    y2, st2 = _bn_relu_conv_call(y1, scale1, shift1, w2f, tb=tb, mm_dtype=mm_dtype)
    scale2, shift2 = _affine_from_stats(st2, g2p, b2p, count)

    if has_shortcut:
        wsf = _flat_w(ws, cp_in, cp_out)             # (1*Cp_in, Cp_out)
        gsp = jnp.pad(gs.reshape(-1), (0, cp_out - c_out))
        bsp = jnp.pad(bs.reshape(-1), (0, cp_out - c_out))
        ysc, stsc = _conv_stats_call(x_hal, wsf, k=1, pad=0, stride=stride,
                                     l_out=l_out, tb=tb, mm_dtype=mm_dtype)
        scale_sc, shift_sc = _affine_from_stats(stsc, gsp, bsp, count)
        sc = ysc
    else:
        sc = x_cp                                    # identity: Lout == L, Cp_in == Cp_out
        scale_sc = jnp.ones((1, cp_out), jnp.float32)
        shift_sc = jnp.zeros((1, cp_out), jnp.float32)

    # bn2 + shortcut-BN (or identity) + add + ReLU
    out = _bn_add_relu_call(y2, sc, scale2, shift2, scale_sc, shift_sc, tb=tb)

    out = out[:, :, :c_out]                          # drop channel padding
    return jnp.transpose(out, (0, 2, 1))             # back to NCL


# ------------------------------ pure-JAX reference ------------------------------

def _ref_forward(x_ncl, params, stride):
    w1, g1, b1, w2, g2, b2, ws, gs, bs = params

    def conv(x, w_klc, s):
        w = jnp.transpose(w_klc, (2, 1, 0))          # (Cout, Cin, K)
        pad = (w.shape[2] - 1) // 2
        return lax.conv_general_dilated(x, w, (s,), [(pad, pad)],
                                        dimension_numbers=('NCH', 'OIH', 'NCH'))

    def bn(y, g, b):
        mean = jnp.mean(y, axis=(0, 2), keepdims=True)
        var = jnp.mean((y - mean) ** 2, axis=(0, 2), keepdims=True)
        return (y - mean) / jnp.sqrt(var + EPS) * g.reshape(1, -1, 1) + b.reshape(1, -1, 1)

    h = jax.nn.relu(bn(conv(x_ncl, w1, stride), g1, b1))
    h2 = bn(conv(h, w2, 1), g2, b2)
    if stride != 1 or w1.shape[1] != w1.shape[2]:
        sc = bn(conv(x_ncl, ws, stride), gs, bs)
    else:
        sc = x_ncl
    return jax.nn.relu(h2 + sc)


# ----------------------------------- main ----------------------------------------

if __name__ == "__main__":
    def make_params(key, c_in, c_out):
        k1, k2, k3 = jax.random.split(key, 3)
        w1 = jax.random.normal(k1, (3, c_in, c_out), jnp.float32) / np.sqrt(3 * c_in)
        w2 = jax.random.normal(k2, (3, c_out, c_out), jnp.float32) / np.sqrt(3 * c_out)
        ws = jax.random.normal(k3, (1, c_in, c_out), jnp.float32) / np.sqrt(c_in)
        g1 = jnp.ones((c_out,), jnp.float32); b1 = jnp.zeros((c_out,), jnp.float32)
        g2 = jnp.ones((c_out,), jnp.float32); b2 = jnp.zeros((c_out,), jnp.float32)
        gs = jnp.ones((c_out,), jnp.float32); bs = jnp.zeros((c_out,), jnp.float32)
        return (w1, g1, b1, w2, g2, b2, ws, gs, bs)

    key = jax.random.PRNGKey(0)
    kp1, kp2, kx1, kx2 = jax.random.split(key, 4)

    # --- test 1: stride 2, channel change -> projection shortcut (conv1x1 + BN) ----
    N, C_IN, C_OUT, L, STRIDE = 2, 4, 8, 16, 2
    params1 = make_params(kp1, C_IN, C_OUT)
    x1 = jax.random.normal(kx1, (N, C_IN, L), jnp.float32)

    fwd_f32 = jax.jit(functools.partial(residual_block_1d, stride=STRIDE,
                                        mm_dtype=jnp.float32, batch_tile=1))
    out1 = jax.block_until_ready(fwd_f32(x1, params1))
    ref1 = jax.block_until_ready(_ref_forward(x1, params1, STRIDE))
    np.testing.assert_allclose(np.asarray(out1), np.asarray(ref1), rtol=1e-4, atol=1e-4)

    # bf16 matmul operands (f32 accumulation) — MXU fast path, looser tolerance.
    fwd_bf16 = jax.jit(functools.partial(residual_block_1d, stride=STRIDE,
                                         mm_dtype=jnp.bfloat16))
    out1_bf16 = jax.block_until_ready(fwd_bf16(x1, params1))
    np.testing.assert_allclose(np.asarray(out1_bf16), np.asarray(ref1),
                               rtol=1e-1, atol=1e-1)

    # --- test 2: stride 1, same channels -> identity shortcut ----------------------
    params2 = make_params(kp2, C_OUT, C_OUT)
    x2 = jax.random.normal(kx2, (N, C_OUT, L), jnp.float32)
    fwd2 = jax.jit(functools.partial(residual_block_1d, stride=1,
                                     mm_dtype=jnp.float32))
    out2 = jax.block_until_ready(fwd2(x2, params2))
    ref2 = jax.block_until_ready(_ref_forward(x2, params2, 1))
    np.testing.assert_allclose(np.asarray(out2), np.asarray(ref2), rtol=1e-4, atol=1e-4)

    print("KERNEL_OK")
</pallas_src>

<mosaic_0001>
module attributes {stable_mosaic.version = 11 : i64} {
  func.func @_conv_stats_kernel(%arg0: i32, %arg1: memref<1x18x128xf32, #tpu.memory_space<vmem>>, %arg2: memref<384x128xf32, #tpu.memory_space<vmem>>, %arg3: memref<1x8x128xf32, #tpu.memory_space<vmem>>, %arg4: memref<1x8x128xf32, #tpu.memory_space<vmem>>) attributes {dimension_semantics = [#tpu.dimension_semantics<parallel>], iteration_bounds = array<i64: 2>, scalar_prefetch = 0 : i64, scratch_operands = 0 : i64, tpu.core_type = #tpu.core_type<tc>, window_params = [{transform_indices = @transform_0, window_bounds = array<i64: 1, 18, 128>}, {pipeline_mode = #tpu.pipeline_mode<synchronous>, transform_indices = @transform_1, window_bounds = array<i64: 384, 128>}, {transform_indices = @transform_2, window_bounds = array<i64: 1, 8, 128>}, {transform_indices = @transform_3, window_bounds = array<i64: 1, 8, 128>}]} {
    %c0 = arith.constant 0 : index
    %c0_0 = arith.constant 0 : index
    %c0_1 = arith.constant 0 : index
    %0 = tpu.strided_load %arg1[%c0, %c0_0, %c0_1] {strides = array<i32: 1, 2, 1>} : memref<1x18x128xf32, #tpu.memory_space<vmem>>, vector<1x8x128xf32>
    %c0_2 = arith.constant 0 : index
    %c1 = arith.constant 1 : index
    %c0_3 = arith.constant 0 : index
    %1 = tpu.strided_load %arg1[%c0_2, %c1, %c0_3] {strides = array<i32: 1, 2, 1>} : memref<1x18x128xf32, #tpu.memory_space<vmem>>, vector<1x8x128xf32>
    %c0_4 = arith.constant 0 : index
    %c2 = arith.constant 2 : index
    %c0_5 = arith.constant 0 : index
    %2 = tpu.strided_load %arg1[%c0_4, %c2, %c0_5] {strides = array<i32: 1, 2, 1>} : memref<1x18x128xf32, #tpu.memory_space<vmem>>, vector<1x8x128xf32>
    %3 = tpu.concatenate %0, %1, %2 in 2 : vector<1x8x128xf32>, vector<1x8x128xf32>, vector<1x8x128xf32> -> vector<1x8x384xf32>
    %4 = vector.shape_cast %3 : vector<1x8x384xf32> to vector<8x384xf32>
    %c0_6 = arith.constant 0 : index
    %c0_7 = arith.constant 0 : index
    %5 = vector.load %arg2[%c0_6, %c0_7] : memref<384x128xf32, #tpu.memory_space<vmem>>, vector<384x128xf32>
    %cst = arith.constant dense<0.000000e+00> : vector<8x128xf32>
    %6 = tpu.matmul %4, %5, %cst {dimension_numbers = #tpu.dot_dimension_numbers<[1], [0], [0], [1], [0, 0, 1, 1], [], []>} : vector<8x384xf32>, vector<384x128xf32>, vector<8x128xf32> -> vector<8x128xf32>
    %7 = vector.shape_cast %6 : vector<8x128xf32> to vector<1x8x128xf32>
    %c0_8 = arith.constant 0 : index
    %c0_9 = arith.constant 0 : index
    %c0_10 = arith.constant 0 : index
    %8 = vector.load %arg3[%c0_8, %c0_9, %c0_10] : memref<1x8x128xf32, #tpu.memory_space<vmem>>, vector<1x8x128xf32>
    tpu.vector_store %arg3[%c0_8, %c0_9, %c0_10], %7 {strides = array<i32>} : memref<1x8x128xf32, #tpu.memory_space<vmem>>, vector<1x8x128xf32>,
    %cst_11 = arith.constant dense<0.000000e+00> : vector<128xf32>
    %9 = vector.multi_reduction <add>, %6, %cst_11 [0] : vector<8x128xf32> to vector<128xf32>
    %10 = vector.shape_cast %9 : vector<128xf32> to vector<1x128xf32>
    %11 = arith.mulf %6, %6 : vector<8x128xf32>
    %cst_12 = arith.constant dense<0.000000e+00> : vector<128xf32>
    %12 = vector.multi_reduction <add>, %11, %cst_12 [0] : vector<8x128xf32> to vector<128xf32>
    %13 = vector.shape_cast %12 : vector<128xf32> to vector<1x128xf32>
    %cst_13 = arith.constant 0.000000e+00 : f32
    %14 = vector.broadcast %cst_13 : f32 to vector<6x128xf32>
    %15 = tpu.concatenate %10, %13, %14 in 0 : vector<1x128xf32>, vector<1x128xf32>, vector<6x128xf32> -> vector<8x128xf32>
    %16 = vector.shape_cast %15 : vector<8x128xf32> to vector<1x8x128xf32>
    %c0_14 = arith.constant 0 : index
    %c0_15 = arith.constant 0 : index
    %c0_16 = arith.constant 0 : index
    %17 = vector.load %arg4[%c0_14, %c0_15, %c0_16] : memref<1x8x128xf32, #tpu.memory_space<vmem>>, vector<1x8x128xf32>
    tpu.vector_store %arg4[%c0_14, %c0_15, %c0_16], %16 {strides = array<i32>} : memref<1x8x128xf32, #tpu.memory_space<vmem>>, vector<1x8x128xf32>,
    return
  }
  func.func @transform_0(%arg0: i32) -> (i32, i32, i32) {
    %c0_i32 = arith.constant 0 : i32
    %c0_i32_0 = arith.constant 0 : i32
    %c0_i32_1 = arith.constant 0 : i32
    return %arg0, %c0_i32, %c0_i32_0 : i32, i32, i32
  }
  func.func @transform_1(%arg0: i32) -> (i32, i32) {
    %c0_i32 = arith.constant 0 : i32
    %c0_i32_0 = arith.constant 0 : i32
    %c0_i32_1 = arith.constant 0 : i32
    return %c0_i32, %c0_i32_0 : i32, i32
  }
  func.func @transform_2(%arg0: i32) -> (i32, i32, i32) {
    %c0_i32 = arith.constant 0 : i32
    %c0_i32_0 = arith.constant 0 : i32
    %c0_i32_1 = arith.constant 0 : i32
    return %arg0, %c0_i32, %c0_i32_0 : i32, i32, i32
  }
  func.func @transform_3(%arg0: i32) -> (i32, i32, i32) {
    %c0_i32 = arith.constant 0 : i32
    %c0_i32_0 = arith.constant 0 : i32
    %c0_i32_1 = arith.constant 0 : i32
    return %arg0, %c0_i32, %c0_i32_0 : i32, i32, i32
  }
}

module attributes {stable_mosaic.version = 11 : i64} {
  func.func @_bn_relu_conv_stats_kernel(%arg0: i32, %arg1: memref<1x8x128xf32, #tpu.memory_space<vmem>>, %arg2: memref<1x128xf32, #tpu.memory_space<vmem>>, %arg3: memref<1x128xf32, #tpu.memory_space<vmem>>, %arg4: memref<384x128xf32, #tpu.memory_space<vmem>>, %arg5: memref<1x8x128xf32, #tpu.memory_space<vmem>>, %arg6: memref<1x8x128xf32, #tpu.memory_space<vmem>>) attributes {dimension_semantics = [#tpu.dimension_semantics<parallel>], iteration_bounds = array<i64: 2>, scalar_prefetch = 0 : i64, scratch_operands = 0 : i64, tpu.core_type = #tpu.core_type<tc>, window_params = [{transform_indices = @transform_0, window_bounds = array<i64: 1, 8, 128>}, {pipeline_mode = #tpu.pipeline_mode<synchronous>, transform_indices = @transform_1, window_bounds = array<i64: 1, 128>}, {pipeline_mode = #tpu.pipeline_mode<synchronous>, transform_indices = @transform_2, window_bounds = array<i64: 1, 128>}, {pipeline_mode = #tpu.pipeline_mode<synchronous>, transform_indices = @transform_3, window_bounds = array<i64: 384, 128>}, {transform_indices = @transform_4, window_bounds = array<i64: 1, 8, 128>}, {transform_indices = @transform_5, window_bounds = array<i64: 1, 8, 128>}]} {
    %c0 = arith.constant 0 : index
    %c0_0 = arith.constant 0 : index
    %c0_1 = arith.constant 0 : index
    %0 = vector.load %arg1[%c0, %c0_0, %c0_1] : memref<1x8x128xf32, #tpu.memory_space<vmem>>, vector<1x8x128xf32>
    %c0_2 = arith.constant 0 : index
    %c0_3 = arith.constant 0 : index
    %1 = vector.load %arg2[%c0_2, %c0_3] : memref<1x128xf32, #tpu.memory_space<vmem>>, vector<1x128xf32>
    %2 = vector.shape_cast %1 : vector<1x128xf32> to vector<1x1x128xf32>
    %3 = vector.broadcast %2 : vector<1x1x128xf32> to vector<1x8x128xf32>
    %4 = arith.mulf %0, %3 : vector<1x8x128xf32>
    %c0_4 = arith.constant 0 : index
    %c0_5 = arith.constant 0 : index
    %5 = vector.load %arg3[%c0_4, %c0_5] : memref<1x128xf32, #tpu.memory_space<vmem>>, vector<1x128xf32>
    %6 = vector.shape_cast %5 : vector<1x128xf32> to vector<1x1x128xf32>
    %7 = vector.broadcast %6 : vector<1x1x128xf32> to vector<1x8x128xf32>
    %8 = arith.addf %4, %7 : vector<1x8x128xf32>
    %cst = arith.constant 0.000000e+00 : f32
    %9 = vector.broadcast %cst : f32 to vector<1x8x128xf32>
    %10 = arith.maximumf %8, %9 : vector<1x8x128xf32>
    %cst_6 = arith.constant 0.000000e+00 : f32
    %11 = vector.broadcast %cst_6 : f32 to vector<1x1x128xf32>
    %12 = vector.extract_strided_slice %10 {offsets = [0, 0, 0], sizes = [1, 7, 128], strides = [1, 1, 1]} : vector<1x8x128xf32> to vector<1x7x128xf32>
    %13 = tpu.concatenate %11, %12 in 1 : vector<1x1x128xf32>, vector<1x7x128xf32> -> vector<1x8x128xf32>
    %14 = vector.extract_strided_slice %10 {offsets = [0, 1, 0], sizes = [1, 7, 128], strides = [1, 1, 1]} : vector<1x8x128xf32> to vector<1x7x128xf32>
    %15 = tpu.concatenate %14, %11 in 1 : vector<1x7x128xf32>, vector<1x1x128xf32> -> vector<1x8x128xf32>
    %16 = tpu.concatenate %13, %10, %15 in 2 : vector<1x8x128xf32>, vector<1x8x128xf32>, vector<1x8x128xf32> -> vector<1x8x384xf32>
    %17 = vector.shape_cast %16 : vector<1x8x384xf32> to vector<8x384xf32>
    %c0_7 = arith.constant 0 : index
    %c0_8 = arith.constant 0 : index
    %18 = vector.load %arg4[%c0_7, %c0_8] : memref<384x128xf32, #tpu.memory_space<vmem>>, vector<384x128xf32>
    %cst_9 = arith.constant dense<0.000000e+00> : vector<8x128xf32>
    %19 = tpu.matmul %17, %18, %cst_9 {dimension_numbers = #tpu.dot_dimension_numbers<[1], [0], [0], [1], [0, 0, 1, 1], [], []>} : vector<8x384xf32>, vector<384x128xf32>, vector<8x128xf32> -> vector<8x128xf32>
    %20 = vector.shape_cast %19 : vector<8x128xf32> to vector<1x8x128xf32>
    %c0_10 = arith.constant 0 : index
    %c0_11 = arith.constant 0 : index
    %c0_12 = arith.constant 0 : index
    %21 = vector.load %arg5[%c0_10, %c0_11, %c0_12] : memref<1x8x128xf32, #tpu.memory_space<vmem>>, vector<1x8x128xf32>
    tpu.vector_store %arg5[%c0_10, %c0_11, %c0_12], %20 {strides = array<i32>} : memref<1x8x128xf32, #tpu.memory_space<vmem>>, vector<1x8x128xf32>,
    %cst_13 = arith.constant dense<0.000000e+00> : vector<128xf32>
    %22 = vector.multi_reduction <add>, %19, %cst_13 [0] : vector<8x128xf32> to vector<128xf32>
    %23 = vector.shape_cast %22 : vector<128xf32> to vector<1x128xf32>
    %24 = arith.mulf %19, %19 : vector<8x128xf32>
    %cst_14 = arith.constant dense<0.000000e+00> : vector<128xf32>
    %25 = vector.multi_reduction <add>, %24, %cst_14 [0] : vector<8x128xf32> to vector<128xf32>
    %26 = vector.shape_cast %25 : vector<128xf32> to vector<1x128xf32>
    %cst_15 = arith.constant 0.000000e+00 : f32
    %27 = vector.broadcast %cst_15 : f32 to vector<6x128xf32>
    %28 = tpu.concatenate %23, %26, %27 in 0 : vector<1x128xf32>, vector<1x128xf32>, vector<6x128xf32> -> vector<8x128xf32>
    %29 = vector.shape_cast %28 : vector<8x128xf32> to vector<1x8x128xf32>
    %c0_16 = arith.constant 0 : index
    %c0_17 = arith.constant 0 : index
    %c0_18 = arith.constant 0 : index
    %30 = vector.load %arg6[%c0_16, %c0_17, %c0_18] : memref<1x8x128xf32, #tpu.memory_space<vmem>>, vector<1x8x128xf32>
    tpu.vector_store %arg6[%c0_16, %c0_17, %c0_18], %29 {strides = array<i32>} : memref<1x8x128xf32, #tpu.memory_space<vmem>>, vector<1x8x128xf32>,
    return
  }
  func.func @transform_0(%arg0: i32) -> (i32, i32, i32) {
    %c0_i32 = arith.constant 0 : i32
    %c0_i32_0 = arith.constant 0 : i32
    %c0_i32_1 = arith.constant 0 : i32
    return %arg0, %c0_i32, %c0_i32_0 : i32, i32, i32
  }
  func.func @transform_1(%arg0: i32) -> (i32, i32) {
    %c0_i32 = arith.constant 0 : i32
    %c0_i32_0 = arith.constant 0 : i32
    %c0_i32_1 = arith.constant 0 : i32
    return %c0_i32, %c0_i32_0 : i32, i32
  }
  func.func @transform_2(%arg0: i32) -> (i32, i32) {
    %c0_i32 = arith.constant 0 : i32
    %c0_i32_0 = arith.constant 0 : i32
    %c0_i32_1 = arith.constant 0 : i32
    return %c0_i32, %c0_i32_0 : i32, i32
  }
  func.func @transform_3(%arg0: i32) -> (i32, i32) {
    %c0_i32 = arith.constant 0 : i32
    %c0_i32_0 = arith.constant 0 : i32
    %c0_i32_1 = arith.constant 0 : i32
    return %c0_i32, %c0_i32_0 : i32, i32
  }
  func.func @transform_4(%arg0: i32) -> (i32, i32, i32) {
    %c0_i32 = arith.constant 0 : i32
    %c0_i32_0 = arith.constant 0 : i32
    %c0_i32_1 = arith.constant 0 : i32
    return %arg0, %c0_i32, %c0_i32_0 : i32, i32, i32
  }
  func.func @transform_5(%arg0: i32) -> (i32, i32, i32) {
    %c0_i32 = arith.constant 0 : i32
    %c0_i32_0 = arith.constant 0 : i32
    %c0_i32_1 = arith.constant 0 : i32
    return %arg0, %c0_i32, %c0_i32_0 : i32, i32, i32
  }
}

module attributes {stable_mosaic.version = 11 : i64} {
  func.func @_bn_add_relu_kernel(%arg0: i32, %arg1: memref<1x8x128xf32, #tpu.memory_space<vmem>>, %arg2: memref<1x8x128xf32, #tpu.memory_space<vmem>>, %arg3: memref<1x128xf32, #tpu.memory_space<vmem>>, %arg4: memref<1x128xf32, #tpu.memory_space<vmem>>, %arg5: memref<1x128xf32, #tpu.memory_space<vmem>>, %arg6: memref<1x128xf32, #tpu.memory_space<vmem>>, %arg7: memref<1x8x128xf32, #tpu.memory_space<vmem>>) attributes {dimension_semantics = [#tpu.dimension_semantics<parallel>], iteration_bounds = array<i64: 2>, scalar_prefetch = 0 : i64, scratch_operands = 0 : i64, tpu.core_type = #tpu.core_type<tc>, window_params = [{transform_indices = @transform_0, window_bounds = array<i64: 1, 8, 128>}, {transform_indices = @transform_1, window_bounds = array<i64: 1, 8, 128>}, {pipeline_mode = #tpu.pipeline_mode<synchronous>, transform_indices = @transform_2, window_bounds = array<i64: 1, 128>}, {pipeline_mode = #tpu.pipeline_mode<synchronous>, transform_indices = @transform_3, window_bounds = array<i64: 1, 128>}, {pipeline_mode = #tpu.pipeline_mode<synchronous>, transform_indices = @transform_4, window_bounds = array<i64: 1, 128>}, {pipeline_mode = #tpu.pipeline_mode<synchronous>, transform_indices = @transform_5, window_bounds = array<i64: 1, 128>}, {transform_indices = @transform_6, window_bounds = array<i64: 1, 8, 128>}]} {
    %c0 = arith.constant 0 : index
    %c0_0 = arith.constant 0 : index
    %c0_1 = arith.constant 0 : index
    %0 = vector.load %arg1[%c0, %c0_0, %c0_1] : memref<1x8x128xf32, #tpu.memory_space<vmem>>, vector<1x8x128xf32>
    %c0_2 = arith.constant 0 : index
    %c0_3 = arith.constant 0 : index
    %1 = vector.load %arg3[%c0_2, %c0_3] : memref<1x128xf32, #tpu.memory_space<vmem>>, vector<1x128xf32>
    %2 = vector.shape_cast %1 : vector<1x128xf32> to vector<1x1x128xf32>
    %3 = vector.broadcast %2 : vector<1x1x128xf32> to vector<1x8x128xf32>
    %4 = arith.mulf %0, %3 : vector<1x8x128xf32>
    %c0_4 = arith.constant 0 : index
    %c0_5 = arith.constant 0 : index
    %5 = vector.load %arg4[%c0_4, %c0_5] : memref<1x128xf32, #tpu.memory_space<vmem>>, vector<1x128xf32>
    %6 = vector.shape_cast %5 : vector<1x128xf32> to vector<1x1x128xf32>
    %7 = vector.broadcast %6 : vector<1x1x128xf32> to vector<1x8x128xf32>
    %8 = arith.addf %4, %7 : vector<1x8x128xf32>
    %c0_6 = arith.constant 0 : index
    %c0_7 = arith.constant 0 : index
    %c0_8 = arith.constant 0 : index
    %9 = vector.load %arg2[%c0_6, %c0_7, %c0_8] : memref<1x8x128xf32, #tpu.memory_space<vmem>>, vector<1x8x128xf32>
    %c0_9 = arith.constant 0 : index
    %c0_10 = arith.constant 0 : index
    %10 = vector.load %arg5[%c0_9, %c0_10] : memref<1x128xf32, #tpu.memory_space<vmem>>, vector<1x128xf32>
    %11 = vector.shape_cast %10 : vector<1x128xf32> to vector<1x1x128xf32>
    %12 = vector.broadcast %11 : vector<1x1x128xf32> to vector<1x8x128xf32>
    %13 = arith.mulf %9, %12 : vector<1x8x128xf32>
    %c0_11 = arith.constant 0 : index
    %c0_12 = arith.constant 0 : index
    %14 = vector.load %arg6[%c0_11, %c0_12] : memref<1x128xf32, #tpu.memory_space<vmem>>, vector<1x128xf32>
    %15 = vector.shape_cast %14 : vector<1x128xf32> to vector<1x1x128xf32>
    %16 = vector.broadcast %15 : vector<1x1x128xf32> to vector<1x8x128xf32>
    %17 = arith.addf %13, %16 : vector<1x8x128xf32>
    %18 = arith.addf %8, %17 : vector<1x8x128xf32>
    %cst = arith.constant 0.000000e+00 : f32
    %19 = vector.broadcast %cst : f32 to vector<1x8x128xf32>
    %20 = arith.maximumf %18, %19 : vector<1x8x128xf32>
    %c0_13 = arith.constant 0 : index
    %c0_14 = arith.constant 0 : index
    %c0_15 = arith.constant 0 : index
    %21 = vector.load %arg7[%c0_13, %c0_14, %c0_15] : memref<1x8x128xf32, #tpu.memory_space<vmem>>, vector<1x8x128xf32>
    tpu.vector_store %arg7[%c0_13, %c0_14, %c0_15], %20 {strides = array<i32>} : memref<1x8x128xf32, #tpu.memory_space<vmem>>, vector<1x8x128xf32>,
    return
  }
  func.func @transform_0(%arg0: i32) -> (i32, i32, i32) {
    %c0_i32 = arith.constant 0 : i32
    %c0_i32_0 = arith.constant 0 : i32
    %c0_i32_1 = arith.constant 0 : i32
    return %arg0, %c0_i32, %c0_i32_0 : i32, i32, i32
  }
  func.func @transform_1(%arg0: i32) -> (i32, i32, i32) {
    %c0_i32 = arith.constant 0 : i32
    %c0_i32_0 = arith.constant 0 : i32
    %c0_i32_1 = arith.constant 0 : i32
    return %arg0, %c0_i32, %c0_i32_0 : i32, i32, i32
  }
  func.func @transform_2(%arg0: i32) -> (i32, i32) {
    %c0_i32 = arith.constant 0 : i32
    %c0_i32_0 = arith.constant 0 : i32
    %c0_i32_1 = arith.constant 0 : i32
    return %c0_i32, %c0_i32_0 : i32, i32
  }
  func.func @transform_3(%arg0: i32) -> (i32, i32) {
    %c0_i32 = arith.constant 0 : i32
    %c0_i32_0 = arith.constant 0 : i32
    %c0_i32_1 = arith.constant 0 : i32
    return %c0_i32, %c0_i32_0 : i32, i32
  }
  func.func @transform_4(%arg0: i32) -> (i32, i32) {
    %c0_i32 = arith.constant 0 : i32
    %c0_i32_0 = arith.constant 0 : i32
    %c0_i32_1 = arith.constant 0 : i32
    return %c0_i32, %c0_i32_0 : i32, i32
  }
  func.func @transform_5(%arg0: i32) -> (i32, i32) {
    %c0_i32 = arith.constant 0 : i32
    %c0_i32_0 = arith.constant 0 : i32
    %c0_i32_1 = arith.constant 0 : i32
    return %c0_i32, %c0_i32_0 : i32, i32
  }
  func.func @transform_6(%arg0: i32) -> (i32, i32, i32) {
    %c0_i32 = arith.constant 0 : i32
    %c0_i32_0 = arith.constant 0 : i32
    %c0_i32_1 = arith.constant 0 : i32
    return %arg0, %c0_i32, %c0_i32_0 : i32, i32, i32
  }
}

module attributes {stable_mosaic.version = 11 : i64} {
  func.func @_conv_stats_kernel(%arg0: i32, %arg1: memref<1x18x128xf32, #tpu.memory_space<vmem>>, %arg2: memref<128x128xf32, #tpu.memory_space<vmem>>, %arg3: memref<1x8x128xf32, #tpu.memory_space<vmem>>, %arg4: memref<1x8x128xf32, #tpu.memory_space<vmem>>) attributes {dimension_semantics = [#tpu.dimension_semantics<parallel>], iteration_bounds = array<i64: 2>, scalar_prefetch = 0 : i64, scratch_operands = 0 : i64, tpu.core_type = #tpu.core_type<tc>, window_params = [{transform_indices = @transform_0, window_bounds = array<i64: 1, 18, 128>}, {pipeline_mode = #tpu.pipeline_mode<synchronous>, transform_indices = @transform_1, window_bounds = array<i64: 128, 128>}, {transform_indices = @transform_2, window_bounds = array<i64: 1, 8, 128>}, {transform_indices = @transform_3, window_bounds = array<i64: 1, 8, 128>}]} {
    %c0 = arith.constant 0 : index
    %c1 = arith.constant 1 : index
    %c0_0 = arith.constant 0 : index
    %0 = tpu.strided_load %arg1[%c0, %c1, %c0_0] {strides = array<i32: 1, 2, 1>} : memref<1x18x128xf32, #tpu.memory_space<vmem>>, vector<1x8x128xf32>
    %1 = vector.shape_cast %0 : vector<1x8x128xf32> to vector<8x128xf32>
    %c0_1 = arith.constant 0 : index
    %c0_2 = arith.constant 0 : index
    %2 = vector.load %arg2[%c0_1, %c0_2] : memref<128x128xf32, #tpu.memory_space<vmem>>, vector<128x128xf32>
    %cst = arith.constant dense<0.000000e+00> : vector<8x128xf32>
    %3 = tpu.matmul %1, %2, %cst {dimension_numbers = #tpu.dot_dimension_numbers<[1], [0], [0], [1], [0, 0, 1, 1], [], []>} : vector<8x128xf32>, vector<128x128xf32>, vector<8x128xf32> -> vector<8x128xf32>
    %4 = vector.shape_cast %3 : vector<8x128xf32> to vector<1x8x128xf32>
    %c0_3 = arith.constant 0 : index
    %c0_4 = arith.constant 0 : index
    %c0_5 = arith.constant 0 : index
    %5 = vector.load %arg3[%c0_3, %c0_4, %c0_5] : memref<1x8x128xf32, #tpu.memory_space<vmem>>, vector<1x8x128xf32>
    tpu.vector_store %arg3[%c0_3, %c0_4, %c0_5], %4 {strides = array<i32>} : memref<1x8x128xf32, #tpu.memory_space<vmem>>, vector<1x8x128xf32>,
    %cst_6 = arith.constant dense<0.000000e+00> : vector<128xf32>
    %6 = vector.multi_reduction <add>, %3, %cst_6 [0] : vector<8x128xf32> to vector<128xf32>
    %7 = vector.shape_cast %6 : vector<128xf32> to vector<1x128xf32>
    %8 = arith.mulf %3, %3 : vector<8x128xf32>
    %cst_7 = arith.constant dense<0.000000e+00> : vector<128xf32>
    %9 = vector.multi_reduction <add>, %8, %cst_7 [0] : vector<8x128xf32> to vector<128xf32>
    %10 = vector.shape_cast %9 : vector<128xf32> to vector<1x128xf32>
    %cst_8 = arith.constant 0.000000e+00 : f32
    %11 = vector.broadcast %cst_8 : f32 to vector<6x128xf32>
    %12 = tpu.concatenate %7, %10, %11 in 0 : vector<1x128xf32>, vector<1x128xf32>, vector<6x128xf32> -> vector<8x128xf32>
    %13 = vector.shape_cast %12 : vector<8x128xf32> to vector<1x8x128xf32>
    %c0_9 = arith.constant 0 : index
    %c0_10 = arith.constant 0 : index
    %c0_11 = arith.constant 0 : index
    %14 = vector.load %arg4[%c0_9, %c0_10, %c0_11] : memref<1x8x128xf32, #tpu.memory_space<vmem>>, vector<1x8x128xf32>
    tpu.vector_store %arg4[%c0_9, %c0_10, %c0_11], %13 {strides = array<i32>} : memref<1x8x128xf32, #tpu.memory_space<vmem>>, vector<1x8x128xf32>,
    return
  }
  func.func @transform_0(%arg0: i32) -> (i32, i32, i32) {
    %c0_i32 = arith.constant 0 : i32
    %c0_i32_0 = arith.constant 0 : i32
    %c0_i32_1 = arith.constant 0 : i32
    return %arg0, %c0_i32, %c0_i32_0 : i32, i32, i32
  }
  func.func @transform_1(%arg0: i32) -> (i32, i32) {
    %c0_i32 = arith.constant 0 : i32
    %c0_i32_0 = arith.constant 0 : i32
    %c0_i32_1 = arith.constant 0 : i32
    return %c0_i32, %c0_i32_0 : i32, i32
  }
  func.func @transform_2(%arg0: i32) -> (i32, i32, i32) {
    %c0_i32 = arith.constant 0 : i32
    %c0_i32_0 = arith.constant 0 : i32
    %c0_i32_1 = arith.constant 0 : i32
    return %arg0, %c0_i32, %c0_i32_0 : i32, i32, i32
  }
  func.func @transform_3(%arg0: i32) -> (i32, i32, i32) {
    %c0_i32 = arith.constant 0 : i32
    %c0_i32_0 = arith.constant 0 : i32
    %c0_i32_1 = arith.constant 0 : i32
    return %arg0, %c0_i32, %c0_i32_0 : i32, i32, i32
  }
}

</mosaic_0001>

<llo_original>
// kernel: residual_block_1d.4
$region0: #{residual_block_1d.4}
  #allocation0 [shape = 'u32[]', space=smem, size = 0x4, offset = 0x4, fixed_abs, tag = 'smem constant byte address 0x4 - core index']
  #allocation1 [shape = 'u32[144,128]{1,0:T(1,128)}', space=vmem, size = 0x12000, scoped, tag = 'internal scratch']
  %s0 = inlined_call_operand.vmem [shape: f32[2,18,128], index: 0, kind: input, shape index: {}]
  %s1 = inlined_call_operand.vmem [shape: f32[384,128], index: 1, kind: input, shape index: {}]
  %s2 = inlined_call_operand.vmem [shape: f32[2,8,128], index: 2, kind: output, shape index: {0}]
  %s3 = inlined_call_operand.vmem [shape: f32[2,8,128], index: 3, kind: output, shape index: {1}]
  %4 = xla_tuple %s2, %s3
  %s5 = sld [smem:[#allocation0]]
  $region49: #{residual_block_1d.4} parent=0
    _
  %s7 = ssub.s32 1, %s5
  %s8 = scalar_select 0, %s7, %s5
  loop: start=0, step=1, limit=4
  $region2: #{residual_block_1d.4} parent=0 // loop_pre_header
    _
  $region3: #{residual_block_1d.4} parent=0 // loop_header
    %s10 = sphi 0, %s14
    %p11 = scmp.ge.s32.totalorder %s10, 4
    %s20 = sphi 0, %s22
    %s23 = sphi 0, %s20
    %s24 = sphi 0, %s23
    %s40 = sphi 0, %s24
    %s44 = sphi 0, %s44
    %s46 = sphi 0, %s44
    %s47 = sphi 0, %s46
    %s61 = sphi 0, %s47
    %s67 = sphi 0, %s69
    %s70 = sphi 0, %s67
    %s71 = sphi 0, %s70
    %s87 = sphi 0, %s71
    %s93 = sphi 0, %s95
    %s96 = sphi 0, %s93
    %s97 = sphi 0, %s96
    %s113 = sphi 0, %s97
  $region4: #{residual_block_1d.4} parent=0 // loop_header_branch
    %13 = sbr.rel (%p11) target = $region8
  $region5: #{residual_block_1d.4} parent=0 // loop_body
    %s15 = ssub.s32 %s10, 1
    %s16 = ssub.s32 %s10, 2
    %s17 = sadd.s32 %s10, 1
    %s18 = ssub.s32 %s10, %s17
    %p19 = scmp.eq.s32.totalorder %s18, 0
    %s21 = sadd.s32 %s20, 1
    %s22 = scalar_select %p19, %s20, %s21
    %p25 = pneg %p19
    %p26 = scmp.eq.s32.totalorder %s10, 1
    %p27 = por %p25, %p26
    %p28 = scmp.ne.s32.totalorder %s20, %s23
    %p29 = scmp.eq.s32.totalorder %s10, 0
    %p30 = por %p28, %p29
    %p31 = scmp.ne.s32.totalorder %s20, %s23
    %p32 = scmp.eq.s32.totalorder %s15, 1
    %p33 = por %p31, %p32
    %p34 = scmp.ne.s32.totalorder %s23, %s24
    %p35 = scmp.eq.s32.totalorder %s15, 0
    %p36 = por %p34, %p35
    %p37 = scmp.ne.s32.totalorder %s23, %s24
    %p38 = scmp.eq.s32.totalorder %s16, 1
    %p39 = por %p37, %p38
    %p41 = scmp.ne.s32.totalorder %s24, %s40
    %p42 = scmp.eq.s32.totalorder %s16, 0
    %p43 = por %p41, %p42
    %s45 = sadd.s32 %s44, 1
    %p48 = scmp.eq.s32.totalorder %s10, 1
    %p49 = scmp.ne.s32.totalorder %s44, %s46
    %p50 = scmp.eq.s32.totalorder %s10, 0
    %p51 = por %p49, %p50
    %p52 = scmp.ne.s32.totalorder %s44, %s46
    %p53 = scmp.eq.s32.totalorder %s15, 1
    %p54 = por %p52, %p53
    %p55 = scmp.ne.s32.totalorder %s46, %s47
    %p56 = scmp.eq.s32.totalorder %s15, 0
    %p57 = por %p55, %p56
    %p58 = scmp.ne.s32.totalorder %s46, %s47
    %p59 = scmp.eq.s32.totalorder %s16, 1
    %p60 = por %p58, %p59
    %p62 = scmp.ne.s32.totalorder %s47, %s61
    %p63 = scmp.eq.s32.totalorder %s16, 0
    %p64 = por %p62, %p63
    %s65 = ssub.s32 %s10, %s17
    %p66 = scmp.eq.s32.totalorder %s65, 0
    %s68 = sadd.s32 %s67, 1
    %s69 = scalar_select %p66, %s67, %s68
    %p72 = pneg %p66
    %p73 = scmp.eq.s32.totalorder %s10, 1
    %p74 = por %p72, %p73
    %p75 = scmp.ne.s32.totalorder %s67, %s70
    %p76 = scmp.eq.s32.totalorder %s10, 0
    %p77 = por %p75, %p76
    %p78 = scmp.ne.s32.totalorder %s67, %s70
    %p79 = scmp.eq.s32.totalorder %s15, 1
    %p80 = por %p78, %p79
    %p81 = scmp.ne.s32.totalorder %s70, %s71
    %p82 = scmp.eq.s32.totalorder %s15, 0
    %p83 = por %p81, %p82
    %p84 = scmp.ne.s32.totalorder %s70, %s71
    %p85 = scmp.eq.s32.totalorder %s16, 1
    %p86 = por %p84, %p85
    %p88 = scmp.ne.s32.totalorder %s71, %s87
    %p89 = scmp.eq.s32.totalorder %s16, 0
    %p90 = por %p88, %p89
    %s91 = ssub.s32 %s10, %s17
    %p92 = scmp.eq.s32.totalorder %s91, 0
    %s94 = sadd.s32 %s93, 1
    %s95 = scalar_select %p92, %s93, %s94
    %p98 = pneg %p92
    %p99 = scmp.eq.s32.totalorder %s10, 1
    %p100 = por %p98, %p99
    %p101 = scmp.ne.s32.totalorder %s93, %s96
    %p102 = scmp.eq.s32.totalorder %s10, 0
    %p103 = por %p101, %p102
    %p104 = scmp.ne.s32.totalorder %s93, %s96
    %p105 = scmp.eq.s32.totalorder %s15, 1
    %p106 = por %p104, %p105
    %p107 = scmp.ne.s32.totalorder %s96, %s97
    %p108 = scmp.eq.s32.totalorder %s15, 0
    %p109 = por %p107, %p108
    %p110 = scmp.ne.s32.totalorder %s96, %s97
    %p111 = scmp.eq.s32.totalorder %s16, 1
    %p112 = por %p110, %p111
    %p114 = scmp.ne.s32.totalorder %s97, %s113
    %p115 = scmp.eq.s32.totalorder %s16, 0
    %p116 = por %p114, %p115
    %p117 = scmp.le.s32.totalorder 1, %s10
    %p118 = scmp.lt.s32.totalorder %s10, 3
    %p119 = pnand %p117, %p118
    %p120 = pneg %p119
    // Predicated region
    $region9: #{residual_block_1d.4} parent=5 // pred_check
      _
    $region10: #{residual_block_1d.4} parent=5 // pred_check_branch
      %122 = sbr.rel (%p119) target = $region12
    $region11: #{residual_block_1d.4} parent=5 // pred_region
      %s123 = ssub.s32 %s10, 1
      // Predicated region
      $region13: #{residual_block_1d.4} parent=11 // pred_check
        %p124 = pneg %p57
      $region14: #{residual_block_1d.4} parent=11 // pred_check_branch
        %126 = sbr.rel (%p124) target = $region16
      $region15: #{residual_block_1d.4} parent=11 // pred_region
        _
      $region16: #{residual_block_1d.4} parent=11 // pred_fallthru
        _
    $region12: #{residual_block_1d.4} parent=5 // pred_fallthru
      _
    %p127 = scmp.lt.s32.totalorder %s10, 2
    // Predicated region
    $region17: #{residual_block_1d.4} parent=5 // pred_check
      %p128 = pneg %p127
    $region18: #{residual_block_1d.4} parent=5 // pred_check_branch
      %130 = sbr.rel (%p128) target = $region20
    $region19: #{residual_block_1d.4} parent=5 // pred_region
      // Predicated region
      $region21: #{residual_block_1d.4} parent=19 // pred_check
        %p131 = pneg %p30
      $region22: #{residual_block_1d.4} parent=19 // pred_check_branch
        %133 = sbr.rel (%p131) target = $region24
      $region23: #{residual_block_1d.4} parent=19 // pred_region
        %p134 = scmp.lt.s32.totalorder %s10, 1
        %s135 = scalar_select %p134, %s10, 1
        %s136 = smul.addr %s135, 3
        %s137 = smul.addr %s136, 8
        %s138 = scalar_lea.vmem %s0, %s137
      $region24: #{residual_block_1d.4} parent=19 // pred_fallthru
        _
    $region20: #{residual_block_1d.4} parent=5 // pred_fallthru
      _
    %p139 = scmp.le.s32.totalorder 1, %s10
    %p140 = scmp.lt.s32.totalorder %s10, 3
    %p141 = pnand %p139, %p140
    %p142 = pneg %p141
    // Predicated region
    $region25: #{residual_block_1d.4} parent=5 // pred_check
      _
    $region26: #{residual_block_1d.4} parent=5 // pred_check_branch
      %144 = sbr.rel (%p141) target = $region28
    $region27: #{residual_block_1d.4} parent=5 // pred_region
      %s145 = ssub.s32 %s10, 1
      %p146 = scmp.lt.s32.totalorder %s15, 1
      %s147 = scalar_select %p146, %s15, 1
      %s148 = smul.addr %s147, 3
      %s149 = smul.addr %s148, 8
      %s150 = scalar_lea.vmem %s0, %s149
      %p151 = pneg %p36
      %p152 = pneg %p33
      %p153 = pneg %p57
      %p154 = pneg %p54
      %p155 = pneg %p83
      %p156 = pneg %p80
      %p157 = scmp.lt.s32.totalorder %s15, 1
      %s158 = scalar_select %p157, %s15, 1
      %s159 = smul.addr %s158, 8
      %s160 = scalar_lea.vmem %s2, %s159
      %p161 = pneg %p109
      %p162 = pneg %p106
      %p163 = scmp.lt.s32.totalorder %s15, 1
      %s164 = scalar_select %p163, %s15, 1
      %s165 = smul.addr %s164, 8
      %s166 = scalar_lea.vmem %s3, %s165
      %p167 = scmp.lt.s32.totalorder %s15, 1
      %s168 = scalar_select %p167, %s15, 1
      %s169 = smul.addr %s168, 3
      %s170 = smul.addr %s169, 8
      %s171 = scalar_lea.vmem %s0, %s170
      %p172 = scmp.lt.s32.totalorder %s15, 1
      %s173 = scalar_select %p172, %s15, 1
      %s174 = smul.addr %s173, 8
      %s175 = scalar_lea.vmem %s2, %s174
      %p176 = scmp.lt.s32.totalorder %s15, 1
      %s177 = scalar_select %p176, %s15, 1
      %s178 = smul.addr %s177, 8
      %s179 = scalar_lea.vmem %s3, %s178
      %v180 = vld [vmem:[%s171] ss:$2 sm:$0xff]
      %s181 = scalar_lea.vmem %s171, 1
      %v182 = vld [vmem:[%s181] ss:$2 sm:$0xff]
      %s183 = scalar_lea.vmem %s171, 2
      %v184 = vld [vmem:[%s183] ss:$2 sm:$0xff]
      %v185 = vld [vmem:[%s1] sm:$0xff]
      %v186 = vld [vmem:[%s1 + $0x8] sm:$0xff]
      %v187 = vld [vmem:[%s1 + $0x10] sm:$0xff]
      %v188 = vld [vmem:[%s1 + $0x18] sm:$0xff]
      %v189 = vld [vmem:[%s1 + $0x20] sm:$0xff]
      %v190 = vld [vmem:[%s1 + $0x28] sm:$0xff]
      %v191 = vld [vmem:[%s1 + $0x30] sm:$0xff]
      %v192 = vld [vmem:[%s1 + $0x38] sm:$0xff]
      %v193 = vld [vmem:[%s1 + $0x40] sm:$0xff]
      %v194 = vld [vmem:[%s1 + $0x48] sm:$0xff]
      %v195 = vld [vmem:[%s1 + $0x50] sm:$0xff]
      %v196 = vld [vmem:[%s1 + $0x58] sm:$0xff]
      %v197 = vld [vmem:[%s1 + $0x60] sm:$0xff]
      %v198 = vld [vmem:[%s1 + $0x68] sm:$0xff]
      %v199 = vld [vmem:[%s1 + $0x70] sm:$0xff]
      %v200 = vld [vmem:[%s1 + $0x78] sm:$0xff]
      %v201 = vld [vmem:[%s1 + $0x80] sm:$0xff]
      %v202 = vld [vmem:[%s1 + $0x88] sm:$0xff]
      %v203 = vld [vmem:[%s1 + $0x90] sm:$0xff]
      %v204 = vld [vmem:[%s1 + $0x98] sm:$0xff]
      %v205 = vld [vmem:[%s1 + $0xa0] sm:$0xff]
      %v206 = vld [vmem:[%s1 + $0xa8] sm:$0xff]
      %v207 = vld [vmem:[%s1 + $0xb0] sm:$0xff]
      %v208 = vld [vmem:[%s1 + $0xb8] sm:$0xff]
      %v209 = vld [vmem:[%s1 + $0xc0] sm:$0xff]
      %v210 = vld [vmem:[%s1 + $0xc8] sm:$0xff]
      %v211 = vld [vmem:[%s1 + $0xd0] sm:$0xff]
      %v212 = vld [vmem:[%s1 + $0xd8] sm:$0xff]
      %v213 = vld [vmem:[%s1 + $0xe0] sm:$0xff]
      %v214 = vld [vmem:[%s1 + $0xe8] sm:$0xff]
      %v215 = vld [vmem:[%s1 + $0xf0] sm:$0xff]
      %v216 = vld [vmem:[%s1 + $0xf8] sm:$0xff]
      %v217 = vld [vmem:[%s1 + $0x100] sm:$0xff]
      %v218 = vld [vmem:[%s1 + $0x108] sm:$0xff]
      %v219 = vld [vmem:[%s1 + $0x110] sm:$0xff]
      %v220 = vld [vmem:[%s1 + $0x118] sm:$0xff]
      %v221 = vld [vmem:[%s1 + $0x120] sm:$0xff]
      %v222 = vld [vmem:[%s1 + $0x128] sm:$0xff]
      %v223 = vld [vmem:[%s1 + $0x130] sm:$0xff]
      %v224 = vld [vmem:[%s1 + $0x138] sm:$0xff]
      %v225 = vld [vmem:[%s1 + $0x140] sm:$0xff]
      %v226 = vld [vmem:[%s1 + $0x148] sm:$0xff]
      %v227 = vld [vmem:[%s1 + $0x150] sm:$0xff]
      %v228 = vld [vmem:[%s1 + $0x158] sm:$0xff]
      %v229 = vld [vmem:[%s1 + $0x160] sm:$0xff]
      %v230 = vld [vmem:[%s1 + $0x168] sm:$0xff]
      %v231 = vld [vmem:[%s1 + $0x170] sm:$0xff]
      %v232 = vld [vmem:[%s1 + $0x178] sm:$0xff]
      %233 = vmatprep.subr.mxu0 0.0
      %234 = vmatpush1.msra.mxu0 %v185
      %235 = vmatprep.subr.mxu0 0.0
      %236 = vmatpush1.msra.mxu0 %v186
      %237 = vmatprep.subr.mxu0 0.0
      %238 = vmatpush1.msra.mxu0 %v187
      %239 = vmatprep.subr.mxu0 0.0
      %240 = vmatpush1.msra.mxu0 %v188
      %241 = vmatprep.subr.mxu0 0.0
      %242 = vmatpush1.msra.mxu0 %v189
      %243 = vmatprep.subr.mxu0 0.0
      %244 = vmatpush1.msra.mxu0 %v190
      %245 = vmatprep.subr.mxu0 0.0
      %246 = vmatpush1.msra.mxu0 %v191
      %247 = vmatprep.subr.mxu0 0.0
      %248 = vmatpush1.msra.mxu0 %v192
      %249 = vmatprep.subr.mxu0 0.0
      %250 = vmatpush1.msra.mxu0 %v193
      %251 = vmatprep.subr.mxu0 0.0
      %252 = vmatpush1.msra.mxu0 %v194
      %253 = vmatprep.subr.mxu0 0.0
      %254 = vmatpush1.msra.mxu0 %v195
      %255 = vmatprep.subr.mxu0 0.0
      %256 = vmatpush1.msra.mxu0 %v196
      %257 = vmatprep.subr.mxu0 0.0
      %258 = vmatpush1.msra.mxu0 %v197
      %259 = vmatprep.subr.mxu0 0.0
      %260 = vmatpush1.msra.mxu0 %v198
      %261 = vmatprep.subr.mxu0 0.0
      %262 = vmatpush1.msra.mxu0 %v199
      %263 = vmatprep.subr.mxu0 0.0
      %264 = vmatpush1.msra.mxu0 %v200
      %265 = vmatprep.subr.mxu0 0.0
      %266 = vmatpush1.msra.mxu0 %v201
      %267 = vmatprep.subr.mxu0 0.0
      %268 = vmatpush1.msra.mxu0 %v202
      %269 = vmatprep.subr.mxu0 0.0
      %270 = vmatpush1.msra.mxu0 %v203
      %271 = vmatprep.subr.mxu0 0.0
      %272 = vmatpush1.msra.mxu0 %v204
      %273 = vmatprep.subr.mxu0 0.0
      %274 = vmatpush1.msra.mxu0 %v205
      %275 = vmatprep.subr.mxu0 0.0
      %276 = vmatpush1.msra.mxu0 %v206
      %277 = vmatprep.subr.mxu0 0.0
      %278 = vmatpush1.msra.mxu0 %v207
      %279 = vmatprep.subr.mxu0 0.0
      %280 = vmatpush1.msra.mxu0 %v208
      %281 = vmatprep.subr.mxu0 0.0
      %282 = vmatpush1.msra.mxu0 %v209
      %283 = vmatprep.subr.mxu0 0.0
      %284 = vmatpush1.msra.mxu0 %v210
      %285 = vmatprep.subr.mxu0 0.0
      %286 = vmatpush1.msra.mxu0 %v211
      %287 = vmatprep.subr.mxu0 0.0
      %288 = vmatpush1.msra.mxu0 %v212
      %289 = vmatprep.subr.mxu0 0.0
      %290 = vmatpush1.msra.mxu0 %v213
      %291 = vmatprep.subr.mxu0 0.0
      %292 = vmatpush1.msra.mxu0 %v214
      %293 = vmatprep.subr.mxu0 0.0
      %294 = vmatpush1.msra.mxu0 %v215
      %295 = vmatprep.subr.mxu0 0.0
      %296 = vmatpush1.msra.mxu0 %v216
      %297 = vmatprep.mubr.f32.mxu0 %v182
      %298 = vmatmul.mubr.f32.gmra.mrb[0].mxu0 %v180
      %v299 = vpop.f32.mrb[0].mxu0
      %v300 = vadd.f32 0.0, %v299
      %v301 = vpop.f32.mrb[0].mxu0
      %302 = vdwg.mxu0
      %303 = vmatprep.subr.mxu0 0.0
      %304 = vmatpush1.msra.mxu0 %v217
      %305 = vmatprep.subr.mxu0 0.0
      %306 = vmatpush1.msra.mxu0 %v218
      %307 = vmatprep.subr.mxu0 0.0
      %308 = vmatpush1.msra.mxu0 %v219
      %309 = vmatprep.subr.mxu0 0.0
      %310 = vmatpush1.msra.mxu0 %v220
      %311 = vmatprep.subr.mxu0 0.0
      %312 = vmatpush1.msra.mxu0 %v221
      %313 = vmatprep.subr.mxu0 0.0
      %314 = vmatpush1.msra.mxu0 %v222
      %315 = vmatprep.subr.mxu0 0.0
      %316 = vmatpush1.msra.mxu0 %v223
      %317 = vmatprep.subr.mxu0 0.0
      %318 = vmatpush1.msra.mxu0 %v224
      %319 = vmatprep.subr.mxu0 0.0
      %320 = vmatpush1.msra.mxu0 %v225
      %321 = vmatprep.subr.mxu0 0.0
      %322 = vmatpush1.msra.mxu0 %v226
      %323 = vmatprep.subr.mxu0 0.0
      %324 = vmatpush1.msra.mxu0 %v227
      %325 = vmatprep.subr.mxu0 0.0
      %326 = vmatpush1.msra.mxu0 %v228
      %327 = vmatprep.subr.mxu0 0.0
      %328 = vmatpush1.msra.mxu0 %v229
      %329 = vmatprep.subr.mxu0 0.0
      %330 = vmatpush1.msra.mxu0 %v230
      %331 = vmatprep.subr.mxu0 0.0
      %332 = vmatpush1.msra.mxu0 %v231
      %333 = vmatprep.subr.mxu0 0.0
      %334 = vmatpush1.msra.mxu0 %v232
      %335 = vmatprep.subr.mxu0 0.0
      %336 = vmatpush1.msra.mxu0 0.0
      %337 = vmatprep.subr.mxu0 0.0
      %338 = vmatpush1.msra.mxu0 0.0
      %339 = vmatprep.subr.mxu0 0.0
      %340 = vmatpush1.msra.mxu0 0.0
      %341 = vmatprep.subr.mxu0 0.0
      %342 = vmatpush1.msra.mxu0 0.0
      %343 = vmatprep.subr.mxu0 0.0
      %344 = vmatpush1.msra.mxu0 0.0
      %345 = vmatprep.subr.mxu0 0.0
      %346 = vmatpush1.msra.mxu0 0.0
      %347 = vmatprep.subr.mxu0 0.0
      %348 = vmatpush1.msra.mxu0 0.0
      %349 = vmatprep.subr.mxu0 0.0
      %350 = vmatpush1.msra.mxu0 0.0
      %351 = vmatprep.subr.mxu0 0.0
      %352 = vmatpush1.msra.mxu0 0.0
      %353 = vmatprep.subr.mxu0 0.0
      %354 = vmatpush1.msra.mxu0 0.0
      %355 = vmatprep.subr.mxu0 0.0
      %356 = vmatpush1.msra.mxu0 0.0
      %357 = vmatprep.subr.mxu0 0.0
      %358 = vmatpush1.msra.mxu0 0.0
      %359 = vmatprep.subr.mxu0 0.0
      %360 = vmatpush1.msra.mxu0 0.0
      %361 = vmatprep.subr.mxu0 0.0
      %362 = vmatpush1.msra.mxu0 0.0
      %363 = vmatprep.subr.mxu0 0.0
      %364 = vmatpush1.msra.mxu0 0.0
      %365 = vmatprep.subr.mxu0 0.0
      %366 = vmatpush1.msra.mxu0 0.0
      %367 = vmatprep.mubr.f32.mxu0 0.0
      %368 = vmatmul.mubr.f32.gmra.mrb[0].mxu0 %v184
      %v369 = vpop.f32.mrb[0].mxu0
      %v370 = vadd.f32 %v300, %v369
      %v371 = vpop.f32.mrb[0].mxu0
      %372 = vdwg.mxu0
      %373 = vst [vmem:[%s175] sm:$0xff] %v370
      %v374 = vrot.slane %v370, 4
      %v375 = vadd.f32 %v370, %v374
      %v376 = vrot.slane %v375, 2
      %v377 = vadd.f32 %v375, %v376
      %v378 = vrot.slane %v377, 1
      %v379 = vadd.f32 %v377, %v378
      %v380 = vmul.f32 %v370, %v370
      %v381 = vrot.slane %v380, 4
      %v382 = vadd.f32 %v380, %v381
      %v383 = vrot.slane %v382, 2
      %v384 = vadd.f32 %v382, %v383
      %v385 = vrot.slane %v384, 1
      %v386 = vadd.f32 %v384, %v385
      %vm387 = vcmask 1040384
      %v388 = vsel %vm387, %v379, %v386
      %vm389 = vcmask 1041408
      %v390 = vsel %vm389, %v388, 0.0
      %391 = vst [vmem:[%s179] sm:$0xff] %v390
      %p392 = scmp.lt.s32.totalorder %s15, 1
      %s393 = scalar_select %p392, %s15, 1
      %s394 = smul.addr %s393, 8
      %s395 = scalar_lea.vmem %s2, %s394
      %p396 = scmp.lt.s32.totalorder %s15, 1
      %s397 = scalar_select %p396, %s15, 1
      %s398 = smul.addr %s397, 8
      %s399 = scalar_lea.vmem %s3, %s398
      // Predicated region
      $region29: #{residual_block_1d.4} parent=27 // pred_check
        %p400 = pneg %p80
      $region30: #{residual_block_1d.4} parent=27 // pred_check_branch
        %402 = sbr.rel (%p400) target = $region32
      $region31: #{residual_block_1d.4} parent=27 // pred_region
        _
      $region32: #{residual_block_1d.4} parent=27 // pred_fallthru
        _
      // Predicated region
      $region33: #{residual_block_1d.4} parent=27 // pred_check
        %p403 = pneg %p106
      $region34: #{residual_block_1d.4} parent=27 // pred_check_branch
        %405 = sbr.rel (%p403) target = $region36
      $region35: #{residual_block_1d.4} parent=27 // pred_region
        _
      $region36: #{residual_block_1d.4} parent=27 // pred_fallthru
        _
    $region28: #{residual_block_1d.4} parent=5 // pred_fallthru
      _
    %p406 = scmp.le.s32.totalorder 2, %s10
    // Predicated region
    $region37: #{residual_block_1d.4} parent=5 // pred_check
      %p407 = pneg %p406
    $region38: #{residual_block_1d.4} parent=5 // pred_check_branch
      %409 = sbr.rel (%p407) target = $region40
    $region39: #{residual_block_1d.4} parent=5 // pred_region
      %s410 = ssub.s32 %s10, 2
      // Predicated region
      $region41: #{residual_block_1d.4} parent=39 // pred_check
        %p411 = pneg %p86
      $region42: #{residual_block_1d.4} parent=39 // pred_check_branch
        %413 = sbr.rel (%p411) target = $region44
      $region43: #{residual_block_1d.4} parent=39 // pred_region
        %p414 = scmp.lt.s32.totalorder %s16, 1
        %s415 = scalar_select %p414, %s16, 1
        %s416 = smul.addr %s415, 8
        %s417 = scalar_lea.vmem %s2, %s416
      $region44: #{residual_block_1d.4} parent=39 // pred_fallthru
        _
      // Predicated region
      $region45: #{residual_block_1d.4} parent=39 // pred_check
        %p418 = pneg %p112
      $region46: #{residual_block_1d.4} parent=39 // pred_check_branch
        %420 = sbr.rel (%p418) target = $region48
      $region47: #{residual_block_1d.4} parent=39 // pred_region
        %p421 = scmp.lt.s32.totalorder %s16, 1
        %s422 = scalar_select %p421, %s16, 1
        %s423 = smul.addr %s422, 8
        %s424 = scalar_lea.vmem %s3, %s423
      $region48: #{residual_block_1d.4} parent=39 // pred_fallthru
        _
    $region40: #{residual_block_1d.4} parent=5 // pred_fallthru
      _
  $region6: #{residual_block_1d.4} parent=0 // loop_footer
    %s14 = sadd.s32 1, %s10
  $region7: #{residual_block_1d.4} parent=0 // loop_footer_branch
    %9 = sbr.rel target = $region3
  $region8: #{residual_block_1d.4} parent=0 // loop_exit
    _

// kernel: residual_block_1d.7
$region0: #{residual_block_1d.7}
  #allocation0 [shape = 'u32[]', space=smem, size = 0x4, offset = 0x4, fixed_abs, tag = 'smem constant byte address 0x4 - core index']
  #allocation1 [shape = 'u32[144,128]{1,0:T(1,128)}', space=vmem, size = 0x12000, scoped, tag = 'internal scratch']
  %s0 = inlined_call_operand.vmem [shape: f32[2,8,128], index: 0, kind: input, shape index: {}]
  %s1 = inlined_call_operand.vmem [shape: f32[2,8,128], index: 1, kind: input, shape index: {}]
  %s2 = inlined_call_operand.vmem [shape: f32[1,128], index: 2, kind: input, shape index: {}]
  %s3 = inlined_call_operand.vmem [shape: f32[1,128], index: 3, kind: input, shape index: {}]
  %s4 = inlined_call_operand.vmem [shape: f32[1,128], index: 4, kind: input, shape index: {}]
  %s5 = inlined_call_operand.vmem [shape: f32[1,128], index: 5, kind: input, shape index: {}]
  %s6 = inlined_call_operand.vmem [shape: f32[2,8,128], index: 6, kind: output, shape index: {}]
  %s7 = sld [smem:[#allocation0]]
  $region57: #{residual_block_1d.7} parent=0
    _
  %s9 = ssub.s32 1, %s7
  %s10 = scalar_select 0, %s9, %s7
  loop: start=0, step=1, limit=4
  $region2: #{residual_block_1d.7} parent=0 // loop_pre_header
    _
  $region3: #{residual_block_1d.7} parent=0 // loop_header
    %s12 = sphi 0, %s16
    %p13 = scmp.ge.s32.totalorder %s12, 4
    %s22 = sphi 0, %s24
    %s25 = sphi 0, %s22
    %s26 = sphi 0, %s25
    %s42 = sphi 0, %s26
    %s48 = sphi 0, %s50
    %s51 = sphi 0, %s48
    %s52 = sphi 0, %s51
    %s68 = sphi 0, %s52
    %s72 = sphi 0, %s72
    %s74 = sphi 0, %s72
    %s75 = sphi 0, %s74
    %s89 = sphi 0, %s75
    %s93 = sphi 0, %s93
    %s95 = sphi 0, %s93
    %s96 = sphi 0, %s95
    %s110 = sphi 0, %s96
    %s114 = sphi 0, %s114
    %s116 = sphi 0, %s114
    %s117 = sphi 0, %s116
    %s131 = sphi 0, %s117
    %s135 = sphi 0, %s135
    %s137 = sphi 0, %s135
    %s138 = sphi 0, %s137
    %s152 = sphi 0, %s138
    %s158 = sphi 0, %s160
    %s161 = sphi 0, %s158
    %s162 = sphi 0, %s161
    %s178 = sphi 0, %s162
  $region4: #{residual_block_1d.7} parent=0 // loop_header_branch
    %15 = sbr.rel (%p13) target = $region8
  $region5: #{residual_block_1d.7} parent=0 // loop_body
    %s17 = ssub.s32 %s12, 1
    %s18 = ssub.s32 %s12, 2
    %s19 = sadd.s32 %s12, 1
    %s20 = ssub.s32 %s12, %s19
    %p21 = scmp.eq.s32.totalorder %s20, 0
    %s23 = sadd.s32 %s22, 1
    %s24 = scalar_select %p21, %s22, %s23
    %p27 = pneg %p21
    %p28 = scmp.eq.s32.totalorder %s12, 1
    %p29 = por %p27, %p28
    %p30 = scmp.ne.s32.totalorder %s22, %s25
    %p31 = scmp.eq.s32.totalorder %s12, 0
    %p32 = por %p30, %p31
    %p33 = scmp.ne.s32.totalorder %s22, %s25
    %p34 = scmp.eq.s32.totalorder %s17, 1
    %p35 = por %p33, %p34
    %p36 = scmp.ne.s32.totalorder %s25, %s26
    %p37 = scmp.eq.s32.totalorder %s17, 0
    %p38 = por %p36, %p37
    %p39 = scmp.ne.s32.totalorder %s25, %s26
    %p40 = scmp.eq.s32.totalorder %s18, 1
    %p41 = por %p39, %p40
    %p43 = scmp.ne.s32.totalorder %s26, %s42
    %p44 = scmp.eq.s32.totalorder %s18, 0
    %p45 = por %p43, %p44
    %s46 = ssub.s32 %s12, %s19
    %p47 = scmp.eq.s32.totalorder %s46, 0
    %s49 = sadd.s32 %s48, 1
    %s50 = scalar_select %p47, %s48, %s49
    %p53 = pneg %p47
    %p54 = scmp.eq.s32.totalorder %s12, 1
    %p55 = por %p53, %p54
    %p56 = scmp.ne.s32.totalorder %s48, %s51
    %p57 = scmp.eq.s32.totalorder %s12, 0
    %p58 = por %p56, %p57
    %p59 = scmp.ne.s32.totalorder %s48, %s51
    %p60 = scmp.eq.s32.totalorder %s17, 1
    %p61 = por %p59, %p60
    %p62 = scmp.ne.s32.totalorder %s51, %s52
    %p63 = scmp.eq.s32.totalorder %s17, 0
    %p64 = por %p62, %p63
    %p65 = scmp.ne.s32.totalorder %s51, %s52
    %p66 = scmp.eq.s32.totalorder %s18, 1
    %p67 = por %p65, %p66
    %p69 = scmp.ne.s32.totalorder %s52, %s68
    %p70 = scmp.eq.s32.totalorder %s18, 0
    %p71 = por %p69, %p70
    %s73 = sadd.s32 %s72, 1
    %p76 = scmp.eq.s32.totalorder %s12, 1
    %p77 = scmp.ne.s32.totalorder %s72, %s74
    %p78 = scmp.eq.s32.totalorder %s12, 0
    %p79 = por %p77, %p78
    %p80 = scmp.ne.s32.totalorder %s72, %s74
    %p81 = scmp.eq.s32.totalorder %s17, 1
    %p82 = por %p80, %p81
    %p83 = scmp.ne.s32.totalorder %s74, %s75
    %p84 = scmp.eq.s32.totalorder %s17, 0
    %p85 = por %p83, %p84
    %p86 = scmp.ne.s32.totalorder %s74, %s75
    %p87 = scmp.eq.s32.totalorder %s18, 1
    %p88 = por %p86, %p87
    %p90 = scmp.ne.s32.totalorder %s75, %s89
    %p91 = scmp.eq.s32.totalorder %s18, 0
    %p92 = por %p90, %p91
    %s94 = sadd.s32 %s93, 1
    %p97 = scmp.eq.s32.totalorder %s12, 1
    %p98 = scmp.ne.s32.totalorder %s93, %s95
    %p99 = scmp.eq.s32.totalorder %s12, 0
    %p100 = por %p98, %p99
    %p101 = scmp.ne.s32.totalorder %s93, %s95
    %p102 = scmp.eq.s32.totalorder %s17, 1
    %p103 = por %p101, %p102
    %p104 = scmp.ne.s32.totalorder %s95, %s96
    %p105 = scmp.eq.s32.totalorder %s17, 0
    %p106 = por %p104, %p105
    %p107 = scmp.ne.s32.totalorder %s95, %s96
    %p108 = scmp.eq.s32.totalorder %s18, 1
    %p109 = por %p107, %p108
    %p111 = scmp.ne.s32.totalorder %s96, %s110
    %p112 = scmp.eq.s32.totalorder %s18, 0
    %p113 = por %p111, %p112
    %s115 = sadd.s32 %s114, 1
    %p118 = scmp.eq.s32.totalorder %s12, 1
    %p119 = scmp.ne.s32.totalorder %s114, %s116
    %p120 = scmp.eq.s32.totalorder %s12, 0
    %p121 = por %p119, %p120
    %p122 = scmp.ne.s32.totalorder %s114, %s116
    %p123 = scmp.eq.s32.totalorder %s17, 1
    %p124 = por %p122, %p123
    %p125 = scmp.ne.s32.totalorder %s116, %s117
    %p126 = scmp.eq.s32.totalorder %s17, 0
    %p127 = por %p125, %p126
    %p128 = scmp.ne.s32.totalorder %s116, %s117
    %p129 = scmp.eq.s32.totalorder %s18, 1
    %p130 = por %p128, %p129
    %p132 = scmp.ne.s32.totalorder %s117, %s131
    %p133 = scmp.eq.s32.totalorder %s18, 0
    %p134 = por %p132, %p133
    %s136 = sadd.s32 %s135, 1
    %p139 = scmp.eq.s32.totalorder %s12, 1
    %p140 = scmp.ne.s32.totalorder %s135, %s137
    %p141 = scmp.eq.s32.totalorder %s12, 0
    %p142 = por %p140, %p141
    %p143 = scmp.ne.s32.totalorder %s135, %s137
    %p144 = scmp.eq.s32.totalorder %s17, 1
    %p145 = por %p143, %p144
    %p146 = scmp.ne.s32.totalorder %s137, %s138
    %p147 = scmp.eq.s32.totalorder %s17, 0
    %p148 = por %p146, %p147
    %p149 = scmp.ne.s32.totalorder %s137, %s138
    %p150 = scmp.eq.s32.totalorder %s18, 1
    %p151 = por %p149, %p150
    %p153 = scmp.ne.s32.totalorder %s138, %s152
    %p154 = scmp.eq.s32.totalorder %s18, 0
    %p155 = por %p153, %p154
    %s156 = ssub.s32 %s12, %s19
    %p157 = scmp.eq.s32.totalorder %s156, 0
    %s159 = sadd.s32 %s158, 1
    %s160 = scalar_select %p157, %s158, %s159
    %p163 = pneg %p157
    %p164 = scmp.eq.s32.totalorder %s12, 1
    %p165 = por %p163, %p164
    %p166 = scmp.ne.s32.totalorder %s158, %s161
    %p167 = scmp.eq.s32.totalorder %s12, 0
    %p168 = por %p166, %p167
    %p169 = scmp.ne.s32.totalorder %s158, %s161
    %p170 = scmp.eq.s32.totalorder %s17, 1
    %p171 = por %p169, %p170
    %p172 = scmp.ne.s32.totalorder %s161, %s162
    %p173 = scmp.eq.s32.totalorder %s17, 0
    %p174 = por %p172, %p173
    %p175 = scmp.ne.s32.totalorder %s161, %s162
    %p176 = scmp.eq.s32.totalorder %s18, 1
    %p177 = por %p175, %p176
    %p179 = scmp.ne.s32.totalorder %s162, %s178
    %p180 = scmp.eq.s32.totalorder %s18, 0
    %p181 = por %p179, %p180
    %p182 = scmp.le.s32.totalorder 1, %s12
    %p183 = scmp.lt.s32.totalorder %s12, 3
    %p184 = pnand %p182, %p183
    %p185 = pneg %p184
    // Predicated region
    $region9: #{residual_block_1d.7} parent=5 // pred_check
      _
    $region10: #{residual_block_1d.7} parent=5 // pred_check_branch
      %187 = sbr.rel (%p184) target = $region12
    $region11: #{residual_block_1d.7} parent=5 // pred_region
      %s188 = ssub.s32 %s12, 1
      // Predicated region
      $region13: #{residual_block_1d.7} parent=11 // pred_check
        %p189 = pneg %p85
      $region14: #{residual_block_1d.7} parent=11 // pred_check_branch
        %191 = sbr.rel (%p189) target = $region16
      $region15: #{residual_block_1d.7} parent=11 // pred_region
        _
      $region16: #{residual_block_1d.7} parent=11 // pred_fallthru
        _
      // Predicated region
      $region17: #{residual_block_1d.7} parent=11 // pred_check
        %p192 = pneg %p106
      $region18: #{residual_block_1d.7} parent=11 // pred_check_branch
        %194 = sbr.rel (%p192) target = $region20
      $region19: #{residual_block_1d.7} parent=11 // pred_region
        _
      $region20: #{residual_block_1d.7} parent=11 // pred_fallthru
        _
      // Predicated region
      $region21: #{residual_block_1d.7} parent=11 // pred_check
        %p195 = pneg %p127
      $region22: #{residual_block_1d.7} parent=11 // pred_check_branch
        %197 = sbr.rel (%p195) target = $region24
      $region23: #{residual_block_1d.7} parent=11 // pred_region
        _
      $region24: #{residual_block_1d.7} parent=11 // pred_fallthru
        _
      // Predicated region
      $region25: #{residual_block_1d.7} parent=11 // pred_check
        %p198 = pneg %p148
      $region26: #{residual_block_1d.7} parent=11 // pred_check_branch
        %200 = sbr.rel (%p198) target = $region28
      $region27: #{residual_block_1d.7} parent=11 // pred_region
        _
      $region28: #{residual_block_1d.7} parent=11 // pred_fallthru
        _
    $region12: #{residual_block_1d.7} parent=5 // pred_fallthru
      _
    %p201 = scmp.lt.s32.totalorder %s12, 2
    // Predicated region
    $region29: #{residual_block_1d.7} parent=5 // pred_check
      %p202 = pneg %p201
    $region30: #{residual_block_1d.7} parent=5 // pred_check_branch
      %204 = sbr.rel (%p202) target = $region32
    $region31: #{residual_block_1d.7} parent=5 // pred_region
      // Predicated region
      $region33: #{residual_block_1d.7} parent=31 // pred_check
        %p205 = pneg %p32
      $region34: #{residual_block_1d.7} parent=31 // pred_check_branch
        %207 = sbr.rel (%p205) target = $region36
      $region35: #{residual_block_1d.7} parent=31 // pred_region
        %p208 = scmp.lt.s32.totalorder %s12, 1
        %s209 = scalar_select %p208, %s12, 1
        %s210 = smul.addr %s209, 8
        %s211 = scalar_lea.vmem %s0, %s210
      $region36: #{residual_block_1d.7} parent=31 // pred_fallthru
        _
      // Predicated region
      $region37: #{residual_block_1d.7} parent=31 // pred_check
        %p212 = pneg %p58
      $region38: #{residual_block_1d.7} parent=31 // pred_check_branch
        %214 = sbr.rel (%p212) target = $region40
      $region39: #{residual_block_1d.7} parent=31 // pred_region
        %p215 = scmp.lt.s32.totalorder %s12, 1
        %s216 = scalar_select %p215, %s12, 1
        %s217 = smul.addr %s216, 8
        %s218 = scalar_lea.vmem %s1, %s217
      $region40: #{residual_block_1d.7} parent=31 // pred_fallthru
        _
    $region32: #{residual_block_1d.7} parent=5 // pred_fallthru
      _
    %p219 = scmp.le.s32.totalorder 1, %s12
    %p220 = scmp.lt.s32.totalorder %s12, 3
    %p221 = pnand %p219, %p220
    %p222 = pneg %p221
    // Predicated region
    $region41: #{residual_block_1d.7} parent=5 // pred_check
      _
    $region42: #{residual_block_1d.7} parent=5 // pred_check_branch
      %224 = sbr.rel (%p221) target = $region44
    $region43: #{residual_block_1d.7} parent=5 // pred_region
      %s225 = ssub.s32 %s12, 1
      %p226 = scmp.lt.s32.totalorder %s17, 1
      %s227 = scalar_select %p226, %s17, 1
      %s228 = smul.addr %s227, 8
      %s229 = scalar_lea.vmem %s0, %s228
      %p230 = pneg %p38
      %p231 = pneg %p35
      %p232 = scmp.lt.s32.totalorder %s17, 1
      %s233 = scalar_select %p232, %s17, 1
      %s234 = smul.addr %s233, 8
      %s235 = scalar_lea.vmem %s1, %s234
      %p236 = pneg %p64
      %p237 = pneg %p61
      %p238 = pneg %p85
      %p239 = pneg %p82
      %p240 = pneg %p106
      %p241 = pneg %p103
      %p242 = pneg %p127
      %p243 = pneg %p124
      %p244 = pneg %p148
      %p245 = pneg %p145
      %p246 = pneg %p174
      %p247 = pneg %p171
      %p248 = scmp.lt.s32.totalorder %s17, 1
      %s249 = scalar_select %p248, %s17, 1
      %s250 = smul.addr %s249, 8
      %s251 = scalar_lea.vmem %s6, %s250
      %p252 = scmp.lt.s32.totalorder %s17, 1
      %s253 = scalar_select %p252, %s17, 1
      %s254 = smul.addr %s253, 8
      %s255 = scalar_lea.vmem %s0, %s254
      %p256 = scmp.lt.s32.totalorder %s17, 1
      %s257 = scalar_select %p256, %s17, 1
      %s258 = smul.addr %s257, 8
      %s259 = scalar_lea.vmem %s1, %s258
      %p260 = scmp.lt.s32.totalorder %s17, 1
      %s261 = scalar_select %p260, %s17, 1
      %s262 = smul.addr %s261, 8
      %s263 = scalar_lea.vmem %s6, %s262
      %v264 = vld [vmem:[%s255] sm:$0xff]
      %v265 = vld [vmem:[%s2] sm:$0x1]
      %v267 = vlaneseq
      %v268 = vshrl.u32 %v267, 7
      %v269 = vsub.s32 0, %v268
      %v270 = vrot.slane %v265, %v269
      %v272 = vmul.f32 %v264, %v270
      %v273 = vld [vmem:[%s3] sm:$0x1]
      %v275 = vlaneseq
      %v276 = vshrl.u32 %v275, 7
      %v277 = vsub.s32 0, %v276
      %v278 = vrot.slane %v273, %v277
      %v280 = vadd.f32 %v272, %v278
      %v281 = vld [vmem:[%s259] sm:$0xff]
      %v282 = vld [vmem:[%s4] sm:$0x1]
      %v284 = vlaneseq
      %v285 = vshrl.u32 %v284, 7
      %v286 = vsub.s32 0, %v285
      %v287 = vrot.slane %v282, %v286
      %v289 = vmul.f32 %v281, %v287
      %v290 = vld [vmem:[%s5] sm:$0x1]
      %v292 = vlaneseq
      %v293 = vshrl.u32 %v292, 7
      %v294 = vsub.s32 0, %v293
      %v295 = vrot.slane %v290, %v294
      %v297 = vadd.f32 %v289, %v295
      %v298 = vadd.f32 %v280, %v297
      %v299 = vmax.f32 %v298, 0.0
      %300 = vst [vmem:[%s263] sm:$0xff] %v299
      %p301 = scmp.lt.s32.totalorder %s17, 1
      %s302 = scalar_select %p301, %s17, 1
      %s303 = smul.addr %s302, 8
      %s304 = scalar_lea.vmem %s6, %s303
      // Predicated region
      $region45: #{residual_block_1d.7} parent=43 // pred_check
        %p305 = pneg %p171
      $region46: #{residual_block_1d.7} parent=43 // pred_check_branch
        %307 = sbr.rel (%p305) target = $region48
      $region47: #{residual_block_1d.7} parent=43 // pred_region
        _
      $region48: #{residual_block_1d.7} parent=43 // pred_fallthru
        _
    $region44: #{residual_block_1d.7} parent=5 // pred_fallthru
      _
    %p308 = scmp.le.s32.totalorder 2, %s12
    // Predicated region
    $region49: #{residual_block_1d.7} parent=5 // pred_check
      %p309 = pneg %p308
    $region50: #{residual_block_1d.7} parent=5 // pred_check_branch
      %311 = sbr.rel (%p309) target = $region52
    $region51: #{residual_block_1d.7} parent=5 // pred_region
      %s312 = ssub.s32 %s12, 2
      // Predicated region
      $region53: #{residual_block_1d.7} parent=51 // pred_check
        %p313 = pneg %p177
      $region54: #{residual_block_1d.7} parent=51 // pred_check_branch
        %315 = sbr.rel (%p313) target = $region56
      $region55: #{residual_block_1d.7} parent=51 // pred_region
        %p316 = scmp.lt.s32.totalorder %s18, 1
        %s317 = scalar_select %p316, %s18, 1
        %s318 = smul.addr %s317, 8
        %s319 = scalar_lea.vmem %s6, %s318
      $region56: #{residual_block_1d.7} parent=51 // pred_fallthru
        _
    $region52: #{residual_block_1d.7} parent=5 // pred_fallthru
      _
  $region6: #{residual_block_1d.7} parent=0 // loop_footer
    %s16 = sadd.s32 1, %s12
  $region7: #{residual_block_1d.7} parent=0 // loop_footer_branch
    %11 = sbr.rel target = $region3
  $region8: #{residual_block_1d.7} parent=0 // loop_exit
    _

// kernel: residual_block_1d.5
$region0: #{residual_block_1d.5}
  #allocation0 [shape = 'u32[]', space=smem, size = 0x4, offset = 0x4, fixed_abs, tag = 'smem constant byte address 0x4 - core index']
  #allocation1 [shape = 'u32[144,128]{1,0:T(1,128)}', space=vmem, size = 0x12000, scoped, tag = 'internal scratch']
  %s0 = inlined_call_operand.vmem [shape: f32[2,8,128], index: 0, kind: input, shape index: {}]
  %s1 = inlined_call_operand.vmem [shape: f32[1,128], index: 1, kind: input, shape index: {}]
  %s2 = inlined_call_operand.vmem [shape: f32[1,128], index: 2, kind: input, shape index: {}]
  %s3 = inlined_call_operand.vmem [shape: f32[384,128], index: 3, kind: input, shape index: {}]
  %s4 = inlined_call_operand.vmem [shape: f32[2,8,128], index: 4, kind: output, shape index: {0}]
  %s5 = inlined_call_operand.vmem [shape: f32[2,8,128], index: 5, kind: output, shape index: {1}]
  %6 = xla_tuple %s4, %s5
  %s7 = sld [smem:[#allocation0]]
  $region57: #{residual_block_1d.5} parent=0
    _
  %s9 = ssub.s32 1, %s7
  %s10 = scalar_select 0, %s9, %s7
  loop: start=0, step=1, limit=4
  $region2: #{residual_block_1d.5} parent=0 // loop_pre_header
    _
  $region3: #{residual_block_1d.5} parent=0 // loop_header
    %s12 = sphi 0, %s16
    %p13 = scmp.ge.s32.totalorder %s12, 4
    %s22 = sphi 0, %s24
    %s25 = sphi 0, %s22
    %s26 = sphi 0, %s25
    %s42 = sphi 0, %s26
    %s46 = sphi 0, %s46
    %s48 = sphi 0, %s46
    %s49 = sphi 0, %s48
    %s63 = sphi 0, %s49
    %s67 = sphi 0, %s67
    %s69 = sphi 0, %s67
    %s70 = sphi 0, %s69
    %s84 = sphi 0, %s70
    %s88 = sphi 0, %s88
    %s90 = sphi 0, %s88
    %s91 = sphi 0, %s90
    %s105 = sphi 0, %s91
    %s111 = sphi 0, %s113
    %s114 = sphi 0, %s111
    %s115 = sphi 0, %s114
    %s131 = sphi 0, %s115
    %s137 = sphi 0, %s139
    %s140 = sphi 0, %s137
    %s141 = sphi 0, %s140
    %s157 = sphi 0, %s141
  $region4: #{residual_block_1d.5} parent=0 // loop_header_branch
    %15 = sbr.rel (%p13) target = $region8
  $region5: #{residual_block_1d.5} parent=0 // loop_body
    %s17 = ssub.s32 %s12, 1
    %s18 = ssub.s32 %s12, 2
    %s19 = sadd.s32 %s12, 1
    %s20 = ssub.s32 %s12, %s19
    %p21 = scmp.eq.s32.totalorder %s20, 0
    %s23 = sadd.s32 %s22, 1
    %s24 = scalar_select %p21, %s22, %s23
    %p27 = pneg %p21
    %p28 = scmp.eq.s32.totalorder %s12, 1
    %p29 = por %p27, %p28
    %p30 = scmp.ne.s32.totalorder %s22, %s25
    %p31 = scmp.eq.s32.totalorder %s12, 0
    %p32 = por %p30, %p31
    %p33 = scmp.ne.s32.totalorder %s22, %s25
    %p34 = scmp.eq.s32.totalorder %s17, 1
    %p35 = por %p33, %p34
    %p36 = scmp.ne.s32.totalorder %s25, %s26
    %p37 = scmp.eq.s32.totalorder %s17, 0
    %p38 = por %p36, %p37
    %p39 = scmp.ne.s32.totalorder %s25, %s26
    %p40 = scmp.eq.s32.totalorder %s18, 1
    %p41 = por %p39, %p40
    %p43 = scmp.ne.s32.totalorder %s26, %s42
    %p44 = scmp.eq.s32.totalorder %s18, 0
    %p45 = por %p43, %p44
    %s47 = sadd.s32 %s46, 1
    %p50 = scmp.eq.s32.totalorder %s12, 1
    %p51 = scmp.ne.s32.totalorder %s46, %s48
    %p52 = scmp.eq.s32.totalorder %s12, 0
    %p53 = por %p51, %p52
    %p54 = scmp.ne.s32.totalorder %s46, %s48
    %p55 = scmp.eq.s32.totalorder %s17, 1
    %p56 = por %p54, %p55
    %p57 = scmp.ne.s32.totalorder %s48, %s49
    %p58 = scmp.eq.s32.totalorder %s17, 0
    %p59 = por %p57, %p58
    %p60 = scmp.ne.s32.totalorder %s48, %s49
    %p61 = scmp.eq.s32.totalorder %s18, 1
    %p62 = por %p60, %p61
    %p64 = scmp.ne.s32.totalorder %s49, %s63
    %p65 = scmp.eq.s32.totalorder %s18, 0
    %p66 = por %p64, %p65
    %s68 = sadd.s32 %s67, 1
    %p71 = scmp.eq.s32.totalorder %s12, 1
    %p72 = scmp.ne.s32.totalorder %s67, %s69
    %p73 = scmp.eq.s32.totalorder %s12, 0
    %p74 = por %p72, %p73
    %p75 = scmp.ne.s32.totalorder %s67, %s69
    %p76 = scmp.eq.s32.totalorder %s17, 1
    %p77 = por %p75, %p76
    %p78 = scmp.ne.s32.totalorder %s69, %s70
    %p79 = scmp.eq.s32.totalorder %s17, 0
    %p80 = por %p78, %p79
    %p81 = scmp.ne.s32.totalorder %s69, %s70
    %p82 = scmp.eq.s32.totalorder %s18, 1
    %p83 = por %p81, %p82
    %p85 = scmp.ne.s32.totalorder %s70, %s84
    %p86 = scmp.eq.s32.totalorder %s18, 0
    %p87 = por %p85, %p86
    %s89 = sadd.s32 %s88, 1
    %p92 = scmp.eq.s32.totalorder %s12, 1
    %p93 = scmp.ne.s32.totalorder %s88, %s90
    %p94 = scmp.eq.s32.totalorder %s12, 0
    %p95 = por %p93, %p94
    %p96 = scmp.ne.s32.totalorder %s88, %s90
    %p97 = scmp.eq.s32.totalorder %s17, 1
    %p98 = por %p96, %p97
    %p99 = scmp.ne.s32.totalorder %s90, %s91
    %p100 = scmp.eq.s32.totalorder %s17, 0
    %p101 = por %p99, %p100
    %p102 = scmp.ne.s32.totalorder %s90, %s91
    %p103 = scmp.eq.s32.totalorder %s18, 1
    %p104 = por %p102, %p103
    %p106 = scmp.ne.s32.totalorder %s91, %s105
    %p107 = scmp.eq.s32.totalorder %s18, 0
    %p108 = por %p106, %p107
    %s109 = ssub.s32 %s12, %s19
    %p110 = scmp.eq.s32.totalorder %s109, 0
    %s112 = sadd.s32 %s111, 1
    %s113 = scalar_select %p110, %s111, %s112
    %p116 = pneg %p110
    %p117 = scmp.eq.s32.totalorder %s12, 1
    %p118 = por %p116, %p117
    %p119 = scmp.ne.s32.totalorder %s111, %s114
    %p120 = scmp.eq.s32.totalorder %s12, 0
    %p121 = por %p119, %p120
    %p122 = scmp.ne.s32.totalorder %s111, %s114
    %p123 = scmp.eq.s32.totalorder %s17, 1
    %p124 = por %p122, %p123
    %p125 = scmp.ne.s32.totalorder %s114, %s115
    %p126 = scmp.eq.s32.totalorder %s17, 0
    %p127 = por %p125, %p126
    %p128 = scmp.ne.s32.totalorder %s114, %s115
    %p129 = scmp.eq.s32.totalorder %s18, 1
    %p130 = por %p128, %p129
    %p132 = scmp.ne.s32.totalorder %s115, %s131
    %p133 = scmp.eq.s32.totalorder %s18, 0
    %p134 = por %p132, %p133
    %s135 = ssub.s32 %s12, %s19
    %p136 = scmp.eq.s32.totalorder %s135, 0
    %s138 = sadd.s32 %s137, 1
    %s139 = scalar_select %p136, %s137, %s138
    %p142 = pneg %p136
    %p143 = scmp.eq.s32.totalorder %s12, 1
    %p144 = por %p142, %p143
    %p145 = scmp.ne.s32.totalorder %s137, %s140
    %p146 = scmp.eq.s32.totalorder %s12, 0
    %p147 = por %p145, %p146
    %p148 = scmp.ne.s32.totalorder %s137, %s140
    %p149 = scmp.eq.s32.totalorder %s17, 1
    %p150 = por %p148, %p149
    %p151 = scmp.ne.s32.totalorder %s140, %s141
    %p152 = scmp.eq.s32.totalorder %s17, 0
    %p153 = por %p151, %p152
    %p154 = scmp.ne.s32.totalorder %s140, %s141
    %p155 = scmp.eq.s32.totalorder %s18, 1
    %p156 = por %p154, %p155
    %p158 = scmp.ne.s32.totalorder %s141, %s157
    %p159 = scmp.eq.s32.totalorder %s18, 0
    %p160 = por %p158, %p159
    %p161 = scmp.le.s32.totalorder 1, %s12
    %p162 = scmp.lt.s32.totalorder %s12, 3
    %p163 = pnand %p161, %p162
    %p164 = pneg %p163
    // Predicated region
    $region9: #{residual_block_1d.5} parent=5 // pred_check
      _
    $region10: #{residual_block_1d.5} parent=5 // pred_check_branch
      %166 = sbr.rel (%p163) target = $region12
    $region11: #{residual_block_1d.5} parent=5 // pred_region
      %s167 = ssub.s32 %s12, 1
      // Predicated region
      $region13: #{residual_block_1d.5} parent=11 // pred_check
        %p168 = pneg %p59
      $region14: #{residual_block_1d.5} parent=11 // pred_check_branch
        %170 = sbr.rel (%p168) target = $region16
      $region15: #{residual_block_1d.5} parent=11 // pred_region
        _
      $region16: #{residual_block_1d.5} parent=11 // pred_fallthru
        _
      // Predicated region
      $region17: #{residual_block_1d.5} parent=11 // pred_check
        %p171 = pneg %p80
      $region18: #{residual_block_1d.5} parent=11 // pred_check_branch
        %173 = sbr.rel (%p171) target = $region20
      $region19: #{residual_block_1d.5} parent=11 // pred_region
        _
      $region20: #{residual_block_1d.5} parent=11 // pred_fallthru
        _
      // Predicated region
      $region21: #{residual_block_1d.5} parent=11 // pred_check
        %p174 = pneg %p101
      $region22: #{residual_block_1d.5} parent=11 // pred_check_branch
        %176 = sbr.rel (%p174) target = $region24
      $region23: #{residual_block_1d.5} parent=11 // pred_region
        _
      $region24: #{residual_block_1d.5} parent=11 // pred_fallthru
        _
    $region12: #{residual_block_1d.5} parent=5 // pred_fallthru
      _
    %p177 = scmp.lt.s32.totalorder %s12, 2
    // Predicated region
    $region25: #{residual_block_1d.5} parent=5 // pred_check
      %p178 = pneg %p177
    $region26: #{residual_block_1d.5} parent=5 // pred_check_branch
      %180 = sbr.rel (%p178) target = $region28
    $region27: #{residual_block_1d.5} parent=5 // pred_region
      // Predicated region
      $region29: #{residual_block_1d.5} parent=27 // pred_check
        %p181 = pneg %p32
      $region30: #{residual_block_1d.5} parent=27 // pred_check_branch
        %183 = sbr.rel (%p181) target = $region32
      $region31: #{residual_block_1d.5} parent=27 // pred_region
        %p184 = scmp.lt.s32.totalorder %s12, 1
        %s185 = scalar_select %p184, %s12, 1
        %s186 = smul.addr %s185, 8
        %s187 = scalar_lea.vmem %s0, %s186
      $region32: #{residual_block_1d.5} parent=27 // pred_fallthru
        _
    $region28: #{residual_block_1d.5} parent=5 // pred_fallthru
      _
    %p188 = scmp.le.s32.totalorder 1, %s12
    %p189 = scmp.lt.s32.totalorder %s12, 3
    %p190 = pnand %p188, %p189
    %p191 = pneg %p190
    // Predicated region
    $region33: #{residual_block_1d.5} parent=5 // pred_check
      _
    $region34: #{residual_block_1d.5} parent=5 // pred_check_branch
      %193 = sbr.rel (%p190) target = $region36
    $region35: #{residual_block_1d.5} parent=5 // pred_region
      %s194 = ssub.s32 %s12, 1
      %p195 = scmp.lt.s32.totalorder %s17, 1
      %s196 = scalar_select %p195, %s17, 1
      %s197 = smul.addr %s196, 8
      %s198 = scalar_lea.vmem %s0, %s197
      %p199 = pneg %p38
      %p200 = pneg %p35
      %p201 = pneg %p59
      %p202 = pneg %p56
      %p203 = pneg %p80
      %p204 = pneg %p77
      %p205 = pneg %p101
      %p206 = pneg %p98
      %p207 = pneg %p127
      %p208 = pneg %p124
      %p209 = scmp.lt.s32.totalorder %s17, 1
      %s210 = scalar_select %p209, %s17, 1
      %s211 = smul.addr %s210, 8
      %s212 = scalar_lea.vmem %s4, %s211
      %p213 = pneg %p153
      %p214 = pneg %p150
      %p215 = scmp.lt.s32.totalorder %s17, 1
      %s216 = scalar_select %p215, %s17, 1
      %s217 = smul.addr %s216, 8
      %s218 = scalar_lea.vmem %s5, %s217
      %p219 = scmp.lt.s32.totalorder %s17, 1
      %s220 = scalar_select %p219, %s17, 1
      %s221 = smul.addr %s220, 8
      %s222 = scalar_lea.vmem %s0, %s221
      %p223 = scmp.lt.s32.totalorder %s17, 1
      %s224 = scalar_select %p223, %s17, 1
      %s225 = smul.addr %s224, 8
      %s226 = scalar_lea.vmem %s4, %s225
      %p227 = scmp.lt.s32.totalorder %s17, 1
      %s228 = scalar_select %p227, %s17, 1
      %s229 = smul.addr %s228, 8
      %s230 = scalar_lea.vmem %s5, %s229
      %v231 = vld [vmem:[%s222] sm:$0xff]
      %v232 = vld [vmem:[%s1] sm:$0x1]
      %v234 = vlaneseq
      %v235 = vshrl.u32 %v234, 7
      %v236 = vsub.s32 0, %v235
      %v237 = vrot.slane %v232, %v236
      %v239 = vmul.f32 %v231, %v237
      %v240 = vld [vmem:[%s2] sm:$0x1]
      %v242 = vlaneseq
      %v243 = vshrl.u32 %v242, 7
      %v244 = vsub.s32 0, %v243
      %v245 = vrot.slane %v240, %v244
      %v247 = vadd.f32 %v239, %v245
      %v248 = vmax.f32 %v247, 0.0
      %v250 = vrot.slane %v248, 7
      %vm252 = vcmask 1040384
      %v253 = vsel %vm252, 0.0, %v250
      %v254 = vrot.slane %v248, 1
      %vm256 = vcmask 1046528
      %v257 = vsel %vm256, %v254, 0.0
      %v258 = vld [vmem:[%s3] sm:$0xff]
      %v259 = vld [vmem:[%s3 + $0x8] sm:$0xff]
      %v260 = vld [vmem:[%s3 + $0x10] sm:$0xff]
      %v261 = vld [vmem:[%s3 + $0x18] sm:$0xff]
      %v262 = vld [vmem:[%s3 + $0x20] sm:$0xff]
      %v263 = vld [vmem:[%s3 + $0x28] sm:$0xff]
      %v264 = vld [vmem:[%s3 + $0x30] sm:$0xff]
      %v265 = vld [vmem:[%s3 + $0x38] sm:$0xff]
      %v266 = vld [vmem:[%s3 + $0x40] sm:$0xff]
      %v267 = vld [vmem:[%s3 + $0x48] sm:$0xff]
      %v268 = vld [vmem:[%s3 + $0x50] sm:$0xff]
      %v269 = vld [vmem:[%s3 + $0x58] sm:$0xff]
      %v270 = vld [vmem:[%s3 + $0x60] sm:$0xff]
      %v271 = vld [vmem:[%s3 + $0x68] sm:$0xff]
      %v272 = vld [vmem:[%s3 + $0x70] sm:$0xff]
      %v273 = vld [vmem:[%s3 + $0x78] sm:$0xff]
      %v274 = vld [vmem:[%s3 + $0x80] sm:$0xff]
      %v275 = vld [vmem:[%s3 + $0x88] sm:$0xff]
      %v276 = vld [vmem:[%s3 + $0x90] sm:$0xff]
      %v277 = vld [vmem:[%s3 + $0x98] sm:$0xff]
      %v278 = vld [vmem:[%s3 + $0xa0] sm:$0xff]
      %v279 = vld [vmem:[%s3 + $0xa8] sm:$0xff]
      %v280 = vld [vmem:[%s3 + $0xb0] sm:$0xff]
      %v281 = vld [vmem:[%s3 + $0xb8] sm:$0xff]
      %v282 = vld [vmem:[%s3 + $0xc0] sm:$0xff]
      %v283 = vld [vmem:[%s3 + $0xc8] sm:$0xff]
      %v284 = vld [vmem:[%s3 + $0xd0] sm:$0xff]
      %v285 = vld [vmem:[%s3 + $0xd8] sm:$0xff]
      %v286 = vld [vmem:[%s3 + $0xe0] sm:$0xff]
      %v287 = vld [vmem:[%s3 + $0xe8] sm:$0xff]
      %v288 = vld [vmem:[%s3 + $0xf0] sm:$0xff]
      %v289 = vld [vmem:[%s3 + $0xf8] sm:$0xff]
      %v290 = vld [vmem:[%s3 + $0x100] sm:$0xff]
      %v291 = vld [vmem:[%s3 + $0x108] sm:$0xff]
      %v292 = vld [vmem:[%s3 + $0x110] sm:$0xff]
      %v293 = vld [vmem:[%s3 + $0x118] sm:$0xff]
      %v294 = vld [vmem:[%s3 + $0x120] sm:$0xff]
      %v295 = vld [vmem:[%s3 + $0x128] sm:$0xff]
      %v296 = vld [vmem:[%s3 + $0x130] sm:$0xff]
      %v297 = vld [vmem:[%s3 + $0x138] sm:$0xff]
      %v298 = vld [vmem:[%s3 + $0x140] sm:$0xff]
      %v299 = vld [vmem:[%s3 + $0x148] sm:$0xff]
      %v300 = vld [vmem:[%s3 + $0x150] sm:$0xff]
      %v301 = vld [vmem:[%s3 + $0x158] sm:$0xff]
      %v302 = vld [vmem:[%s3 + $0x160] sm:$0xff]
      %v303 = vld [vmem:[%s3 + $0x168] sm:$0xff]
      %v304 = vld [vmem:[%s3 + $0x170] sm:$0xff]
      %v305 = vld [vmem:[%s3 + $0x178] sm:$0xff]
      %306 = vmatprep.subr.mxu0 0.0
      %307 = vmatpush1.msra.mxu0 %v258
      %308 = vmatprep.subr.mxu0 0.0
      %309 = vmatpush1.msra.mxu0 %v259
      %310 = vmatprep.subr.mxu0 0.0
      %311 = vmatpush1.msra.mxu0 %v260
      %312 = vmatprep.subr.mxu0 0.0
      %313 = vmatpush1.msra.mxu0 %v261
      %314 = vmatprep.subr.mxu0 0.0
      %315 = vmatpush1.msra.mxu0 %v262
      %316 = vmatprep.subr.mxu0 0.0
      %317 = vmatpush1.msra.mxu0 %v263
      %318 = vmatprep.subr.mxu0 0.0
      %319 = vmatpush1.msra.mxu0 %v264
      %320 = vmatprep.subr.mxu0 0.0
      %321 = vmatpush1.msra.mxu0 %v265
      %322 = vmatprep.subr.mxu0 0.0
      %323 = vmatpush1.msra.mxu0 %v266
      %324 = vmatprep.subr.mxu0 0.0
      %325 = vmatpush1.msra.mxu0 %v267
      %326 = vmatprep.subr.mxu0 0.0
      %327 = vmatpush1.msra.mxu0 %v268
      %328 = vmatprep.subr.mxu0 0.0
      %329 = vmatpush1.msra.mxu0 %v269
      %330 = vmatprep.subr.mxu0 0.0
      %331 = vmatpush1.msra.mxu0 %v270
      %332 = vmatprep.subr.mxu0 0.0
      %333 = vmatpush1.msra.mxu0 %v271
      %334 = vmatprep.subr.mxu0 0.0
      %335 = vmatpush1.msra.mxu0 %v272
      %336 = vmatprep.subr.mxu0 0.0
      %337 = vmatpush1.msra.mxu0 %v273
      %338 = vmatprep.subr.mxu0 0.0
      %339 = vmatpush1.msra.mxu0 %v274
      %340 = vmatprep.subr.mxu0 0.0
      %341 = vmatpush1.msra.mxu0 %v275
      %342 = vmatprep.subr.mxu0 0.0
      %343 = vmatpush1.msra.mxu0 %v276
      %344 = vmatprep.subr.mxu0 0.0
      %345 = vmatpush1.msra.mxu0 %v277
      %346 = vmatprep.subr.mxu0 0.0
      %347 = vmatpush1.msra.mxu0 %v278
      %348 = vmatprep.subr.mxu0 0.0
      %349 = vmatpush1.msra.mxu0 %v279
      %350 = vmatprep.subr.mxu0 0.0
      %351 = vmatpush1.msra.mxu0 %v280
      %352 = vmatprep.subr.mxu0 0.0
      %353 = vmatpush1.msra.mxu0 %v281
      %354 = vmatprep.subr.mxu0 0.0
      %355 = vmatpush1.msra.mxu0 %v282
      %356 = vmatprep.subr.mxu0 0.0
      %357 = vmatpush1.msra.mxu0 %v283
      %358 = vmatprep.subr.mxu0 0.0
      %359 = vmatpush1.msra.mxu0 %v284
      %360 = vmatprep.subr.mxu0 0.0
      %361 = vmatpush1.msra.mxu0 %v285
      %362 = vmatprep.subr.mxu0 0.0
      %363 = vmatpush1.msra.mxu0 %v286
      %364 = vmatprep.subr.mxu0 0.0
      %365 = vmatpush1.msra.mxu0 %v287
      %366 = vmatprep.subr.mxu0 0.0
      %367 = vmatpush1.msra.mxu0 %v288
      %368 = vmatprep.subr.mxu0 0.0
      %369 = vmatpush1.msra.mxu0 %v289
      %370 = vmatprep.mubr.f32.mxu0 %v248
      %371 = vmatmul.mubr.f32.gmra.mrb[0].mxu0 %v253
      %v372 = vpop.f32.mrb[0].mxu0
      %v373 = vadd.f32 0.0, %v372
      %v374 = vpop.f32.mrb[0].mxu0
      %375 = vdwg.mxu0
      %376 = vmatprep.subr.mxu0 0.0
      %377 = vmatpush1.msra.mxu0 %v290
      %378 = vmatprep.subr.mxu0 0.0
      %379 = vmatpush1.msra.mxu0 %v291
      %380 = vmatprep.subr.mxu0 0.0
      %381 = vmatpush1.msra.mxu0 %v292
      %382 = vmatprep.subr.mxu0 0.0
      %383 = vmatpush1.msra.mxu0 %v293
      %384 = vmatprep.subr.mxu0 0.0
      %385 = vmatpush1.msra.mxu0 %v294
      %386 = vmatprep.subr.mxu0 0.0
      %387 = vmatpush1.msra.mxu0 %v295
      %388 = vmatprep.subr.mxu0 0.0
      %389 = vmatpush1.msra.mxu0 %v296
      %390 = vmatprep.subr.mxu0 0.0
      %391 = vmatpush1.msra.mxu0 %v297
      %392 = vmatprep.subr.mxu0 0.0
      %393 = vmatpush1.msra.mxu0 %v298
      %394 = vmatprep.subr.mxu0 0.0
      %395 = vmatpush1.msra.mxu0 %v299
      %396 = vmatprep.subr.mxu0 0.0
      %397 = vmatpush1.msra.mxu0 %v300
      %398 = vmatprep.subr.mxu0 0.0
      %399 = vmatpush1.msra.mxu0 %v301
      %400 = vmatprep.subr.mxu0 0.0
      %401 = vmatpush1.msra.mxu0 %v302
      %402 = vmatprep.subr.mxu0 0.0
      %403 = vmatpush1.msra.mxu0 %v303
      %404 = vmatprep.subr.mxu0 0.0
      %405 = vmatpush1.msra.mxu0 %v304
      %406 = vmatprep.subr.mxu0 0.0
      %407 = vmatpush1.msra.mxu0 %v305
      %408 = vmatprep.subr.mxu0 0.0
      %409 = vmatpush1.msra.mxu0 0.0
      %410 = vmatprep.subr.mxu0 0.0
      %411 = vmatpush1.msra.mxu0 0.0
      %412 = vmatprep.subr.mxu0 0.0
      %413 = vmatpush1.msra.mxu0 0.0
      %414 = vmatprep.subr.mxu0 0.0
      %415 = vmatpush1.msra.mxu0 0.0
      %416 = vmatprep.subr.mxu0 0.0
      %417 = vmatpush1.msra.mxu0 0.0
      %418 = vmatprep.subr.mxu0 0.0
      %419 = vmatpush1.msra.mxu0 0.0
      %420 = vmatprep.subr.mxu0 0.0
      %421 = vmatpush1.msra.mxu0 0.0
      %422 = vmatprep.subr.mxu0 0.0
      %423 = vmatpush1.msra.mxu0 0.0
      %424 = vmatprep.subr.mxu0 0.0
      %425 = vmatpush1.msra.mxu0 0.0
      %426 = vmatprep.subr.mxu0 0.0
      %427 = vmatpush1.msra.mxu0 0.0
      %428 = vmatprep.subr.mxu0 0.0
      %429 = vmatpush1.msra.mxu0 0.0
      %430 = vmatprep.subr.mxu0 0.0
      %431 = vmatpush1.msra.mxu0 0.0
      %432 = vmatprep.subr.mxu0 0.0
      %433 = vmatpush1.msra.mxu0 0.0
      %434 = vmatprep.subr.mxu0 0.0
      %435 = vmatpush1.msra.mxu0 0.0
      %436 = vmatprep.subr.mxu0 0.0
      %437 = vmatpush1.msra.mxu0 0.0
      %438 = vmatprep.subr.mxu0 0.0
      %439 = vmatpush1.msra.mxu0 0.0
      %440 = vmatprep.mubr.f32.mxu0 0.0
      %441 = vmatmul.mubr.f32.gmra.mrb[0].mxu0 %v257
      %v442 = vpop.f32.mrb[0].mxu0
      %v443 = vadd.f32 %v373, %v442
      %v444 = vpop.f32.mrb[0].mxu0
      %445 = vdwg.mxu0
      %446 = vst [vmem:[%s226] sm:$0xff] %v443
      %v447 = vrot.slane %v443, 4
      %v448 = vadd.f32 %v443, %v447
      %v449 = vrot.slane %v448, 2
      %v450 = vadd.f32 %v448, %v449
      %v451 = vrot.slane %v450, 1
      %v452 = vadd.f32 %v450, %v451
      %v453 = vmul.f32 %v443, %v443
      %v454 = vrot.slane %v453, 4
      %v455 = vadd.f32 %v453, %v454
      %v456 = vrot.slane %v455, 2
      %v457 = vadd.f32 %v455, %v456
      %v458 = vrot.slane %v457, 1
      %v459 = vadd.f32 %v457, %v458
      %v460 = vsel %vm252, %v452, %v459
      %vm461 = vcmask 1041408
      %v462 = vsel %vm461, %v460, 0.0
      %463 = vst [vmem:[%s230] sm:$0xff] %v462
      %p464 = scmp.lt.s32.totalorder %s17, 1
      %s465 = scalar_select %p464, %s17, 1
      %s466 = smul.addr %s465, 8
      %s467 = scalar_lea.vmem %s4, %s466
      %p468 = scmp.lt.s32.totalorder %s17, 1
      %s469 = scalar_select %p468, %s17, 1
      %s470 = smul.addr %s469, 8
      %s471 = scalar_lea.vmem %s5, %s470
      // Predicated region
      $region37: #{residual_block_1d.5} parent=35 // pred_check
        %p472 = pneg %p124
      $region38: #{residual_block_1d.5} parent=35 // pred_check_branch
        %474 = sbr.rel (%p472) target = $region40
      $region39: #{residual_block_1d.5} parent=35 // pred_region
        _
      $region40: #{residual_block_1d.5} parent=35 // pred_fallthru
        _
      // Predicated region
      $region41: #{residual_block_1d.5} parent=35 // pred_check
        %p475 = pneg %p150
      $region42: #{residual_block_1d.5} parent=35 // pred_check_branch
        %477 = sbr.rel (%p475) target = $region44
      $region43: #{residual_block_1d.5} parent=35 // pred_region
        _
      $region44: #{residual_block_1d.5} parent=35 // pred_fallthru
        _
    $region36: #{residual_block_1d.5} parent=5 // pred_fallthru
      _
    %p478 = scmp.le.s32.totalorder 2, %s12
    // Predicated region
    $region45: #{residual_block_1d.5} parent=5 // pred_check
      %p479 = pneg %p478
    $region46: #{residual_block_1d.5} parent=5 // pred_check_branch
      %481 = sbr.rel (%p479) target = $region48
    $region47: #{residual_block_1d.5} parent=5 // pred_region
      %s482 = ssub.s32 %s12, 2
      // Predicated region
      $region49: #{residual_block_1d.5} parent=47 // pred_check
        %p483 = pneg %p130
      $region50: #{residual_block_1d.5} parent=47 // pred_check_branch
        %485 = sbr.rel (%p483) target = $region52
      $region51: #{residual_block_1d.5} parent=47 // pred_region
        %p486 = scmp.lt.s32.totalorder %s18, 1
        %s487 = scalar_select %p486, %s18, 1
        %s488 = smul.addr %s487, 8
        %s489 = scalar_lea.vmem %s4, %s488
      $region52: #{residual_block_1d.5} parent=47 // pred_fallthru
        _
      // Predicated region
      $region53: #{residual_block_1d.5} parent=47 // pred_check
        %p490 = pneg %p156
      $region54: #{residual_block_1d.5} parent=47 // pred_check_branch
        %492 = sbr.rel (%p490) target = $region56
      $region55: #{residual_block_1d.5} parent=47 // pred_region
        %p493 = scmp.lt.s32.totalorder %s18, 1
        %s494 = scalar_select %p493, %s18, 1
        %s495 = smul.addr %s494, 8
        %s496 = scalar_lea.vmem %s5, %s495
      $region56: #{residual_block_1d.5} parent=47 // pred_fallthru
        _
    $region48: #{residual_block_1d.5} parent=5 // pred_fallthru
      _
  $region6: #{residual_block_1d.5} parent=0 // loop_footer
    %s16 = sadd.s32 1, %s12
  $region7: #{residual_block_1d.5} parent=0 // loop_footer_branch
    %11 = sbr.rel target = $region3
  $region8: #{residual_block_1d.5} parent=0 // loop_exit
    _

// kernel: residual_block_1d.6
$region0: #{residual_block_1d.6}
  #allocation0 [shape = 'u32[]', space=smem, size = 0x4, offset = 0x4, fixed_abs, tag = 'smem constant byte address 0x4 - core index']
  #allocation1 [shape = 'u32[144,128]{1,0:T(1,128)}', space=vmem, size = 0x12000, scoped, tag = 'internal scratch']
  %s0 = inlined_call_operand.vmem [shape: f32[2,18,128], index: 0, kind: input, shape index: {}]
  %s1 = inlined_call_operand.vmem [shape: f32[128,128], index: 1, kind: input, shape index: {}]
  %s2 = inlined_call_operand.vmem [shape: f32[2,8,128], index: 2, kind: output, shape index: {0}]
  %s3 = inlined_call_operand.vmem [shape: f32[2,8,128], index: 3, kind: output, shape index: {1}]
  %4 = xla_tuple %s2, %s3
  %s5 = sld [smem:[#allocation0]]
  $region49: #{residual_block_1d.6} parent=0
    _
  %s7 = ssub.s32 1, %s5
  %s8 = scalar_select 0, %s7, %s5
  loop: start=0, step=1, limit=4
  $region2: #{residual_block_1d.6} parent=0 // loop_pre_header
    _
  $region3: #{residual_block_1d.6} parent=0 // loop_header
    %s10 = sphi 0, %s14
    %p11 = scmp.ge.s32.totalorder %s10, 4
    %s20 = sphi 0, %s22
    %s23 = sphi 0, %s20
    %s24 = sphi 0, %s23
    %s40 = sphi 0, %s24
    %s44 = sphi 0, %s44
    %s46 = sphi 0, %s44
    %s47 = sphi 0, %s46
    %s61 = sphi 0, %s47
    %s67 = sphi 0, %s69
    %s70 = sphi 0, %s67
    %s71 = sphi 0, %s70
    %s87 = sphi 0, %s71
    %s93 = sphi 0, %s95
    %s96 = sphi 0, %s93
    %s97 = sphi 0, %s96
    %s113 = sphi 0, %s97
  $region4: #{residual_block_1d.6} parent=0 // loop_header_branch
    %13 = sbr.rel (%p11) target = $region8
  $region5: #{residual_block_1d.6} parent=0 // loop_body
    %s15 = ssub.s32 %s10, 1
    %s16 = ssub.s32 %s10, 2
    %s17 = sadd.s32 %s10, 1
    %s18 = ssub.s32 %s10, %s17
    %p19 = scmp.eq.s32.totalorder %s18, 0
    %s21 = sadd.s32 %s20, 1
    %s22 = scalar_select %p19, %s20, %s21
    %p25 = pneg %p19
    %p26 = scmp.eq.s32.totalorder %s10, 1
    %p27 = por %p25, %p26
    %p28 = scmp.ne.s32.totalorder %s20, %s23
    %p29 = scmp.eq.s32.totalorder %s10, 0
    %p30 = por %p28, %p29
    %p31 = scmp.ne.s32.totalorder %s20, %s23
    %p32 = scmp.eq.s32.totalorder %s15, 1
    %p33 = por %p31, %p32
    %p34 = scmp.ne.s32.totalorder %s23, %s24
    %p35 = scmp.eq.s32.totalorder %s15, 0
    %p36 = por %p34, %p35
    %p37 = scmp.ne.s32.totalorder %s23, %s24
    %p38 = scmp.eq.s32.totalorder %s16, 1
    %p39 = por %p37, %p38
    %p41 = scmp.ne.s32.totalorder %s24, %s40
    %p42 = scmp.eq.s32.totalorder %s16, 0
    %p43 = por %p41, %p42
    %s45 = sadd.s32 %s44, 1
    %p48 = scmp.eq.s32.totalorder %s10, 1
    %p49 = scmp.ne.s32.totalorder %s44, %s46
    %p50 = scmp.eq.s32.totalorder %s10, 0
    %p51 = por %p49, %p50
    %p52 = scmp.ne.s32.totalorder %s44, %s46
    %p53 = scmp.eq.s32.totalorder %s15, 1
    %p54 = por %p52, %p53
    %p55 = scmp.ne.s32.totalorder %s46, %s47
    %p56 = scmp.eq.s32.totalorder %s15, 0
    %p57 = por %p55, %p56
    %p58 = scmp.ne.s32.totalorder %s46, %s47
    %p59 = scmp.eq.s32.totalorder %s16, 1
    %p60 = por %p58, %p59
    %p62 = scmp.ne.s32.totalorder %s47, %s61
    %p63 = scmp.eq.s32.totalorder %s16, 0
    %p64 = por %p62, %p63
    %s65 = ssub.s32 %s10, %s17
    %p66 = scmp.eq.s32.totalorder %s65, 0
    %s68 = sadd.s32 %s67, 1
    %s69 = scalar_select %p66, %s67, %s68
    %p72 = pneg %p66
    %p73 = scmp.eq.s32.totalorder %s10, 1
    %p74 = por %p72, %p73
    %p75 = scmp.ne.s32.totalorder %s67, %s70
    %p76 = scmp.eq.s32.totalorder %s10, 0
    %p77 = por %p75, %p76
    %p78 = scmp.ne.s32.totalorder %s67, %s70
    %p79 = scmp.eq.s32.totalorder %s15, 1
    %p80 = por %p78, %p79
    %p81 = scmp.ne.s32.totalorder %s70, %s71
    %p82 = scmp.eq.s32.totalorder %s15, 0
    %p83 = por %p81, %p82
    %p84 = scmp.ne.s32.totalorder %s70, %s71
    %p85 = scmp.eq.s32.totalorder %s16, 1
    %p86 = por %p84, %p85
    %p88 = scmp.ne.s32.totalorder %s71, %s87
    %p89 = scmp.eq.s32.totalorder %s16, 0
    %p90 = por %p88, %p89
    %s91 = ssub.s32 %s10, %s17
    %p92 = scmp.eq.s32.totalorder %s91, 0
    %s94 = sadd.s32 %s93, 1
    %s95 = scalar_select %p92, %s93, %s94
    %p98 = pneg %p92
    %p99 = scmp.eq.s32.totalorder %s10, 1
    %p100 = por %p98, %p99
    %p101 = scmp.ne.s32.totalorder %s93, %s96
    %p102 = scmp.eq.s32.totalorder %s10, 0
    %p103 = por %p101, %p102
    %p104 = scmp.ne.s32.totalorder %s93, %s96
    %p105 = scmp.eq.s32.totalorder %s15, 1
    %p106 = por %p104, %p105
    %p107 = scmp.ne.s32.totalorder %s96, %s97
    %p108 = scmp.eq.s32.totalorder %s15, 0
    %p109 = por %p107, %p108
    %p110 = scmp.ne.s32.totalorder %s96, %s97
    %p111 = scmp.eq.s32.totalorder %s16, 1
    %p112 = por %p110, %p111
    %p114 = scmp.ne.s32.totalorder %s97, %s113
    %p115 = scmp.eq.s32.totalorder %s16, 0
    %p116 = por %p114, %p115
    %p117 = scmp.le.s32.totalorder 1, %s10
    %p118 = scmp.lt.s32.totalorder %s10, 3
    %p119 = pnand %p117, %p118
    %p120 = pneg %p119
    // Predicated region
    $region9: #{residual_block_1d.6} parent=5 // pred_check
      _
    $region10: #{residual_block_1d.6} parent=5 // pred_check_branch
      %122 = sbr.rel (%p119) target = $region12
    $region11: #{residual_block_1d.6} parent=5 // pred_region
      %s123 = ssub.s32 %s10, 1
      // Predicated region
      $region13: #{residual_block_1d.6} parent=11 // pred_check
        %p124 = pneg %p57
      $region14: #{residual_block_1d.6} parent=11 // pred_check_branch
        %126 = sbr.rel (%p124) target = $region16
      $region15: #{residual_block_1d.6} parent=11 // pred_region
        _
      $region16: #{residual_block_1d.6} parent=11 // pred_fallthru
        _
    $region12: #{residual_block_1d.6} parent=5 // pred_fallthru
      _
    %p127 = scmp.lt.s32.totalorder %s10, 2
    // Predicated region
    $region17: #{residual_block_1d.6} parent=5 // pred_check
      %p128 = pneg %p127
    $region18: #{residual_block_1d.6} parent=5 // pred_check_branch
      %130 = sbr.rel (%p128) target = $region20
    $region19: #{residual_block_1d.6} parent=5 // pred_region
      // Predicated region
      $region21: #{residual_block_1d.6} parent=19 // pred_check
        %p131 = pneg %p30
      $region22: #{residual_block_1d.6} parent=19 // pred_check_branch
        %133 = sbr.rel (%p131) target = $region24
      $region23: #{residual_block_1d.6} parent=19 // pred_region
        %p134 = scmp.lt.s32.totalorder %s10, 1
        %s135 = scalar_select %p134, %s10, 1
        %s136 = smul.addr %s135, 3
        %s137 = smul.addr %s136, 8
        %s138 = scalar_lea.vmem %s0, %s137
      $region24: #{residual_block_1d.6} parent=19 // pred_fallthru
        _
    $region20: #{residual_block_1d.6} parent=5 // pred_fallthru
      _
    %p139 = scmp.le.s32.totalorder 1, %s10
    %p140 = scmp.lt.s32.totalorder %s10, 3
    %p141 = pnand %p139, %p140
    %p142 = pneg %p141
    // Predicated region
    $region25: #{residual_block_1d.6} parent=5 // pred_check
      _
    $region26: #{residual_block_1d.6} parent=5 // pred_check_branch
      %144 = sbr.rel (%p141) target = $region28
    $region27: #{residual_block_1d.6} parent=5 // pred_region
      %s145 = ssub.s32 %s10, 1
      %p146 = scmp.lt.s32.totalorder %s15, 1
      %s147 = scalar_select %p146, %s15, 1
      %s148 = smul.addr %s147, 3
      %s149 = smul.addr %s148, 8
      %s150 = scalar_lea.vmem %s0, %s149
      %p151 = pneg %p36
      %p152 = pneg %p33
      %p153 = pneg %p57
      %p154 = pneg %p54
      %p155 = pneg %p83
      %p156 = pneg %p80
      %p157 = scmp.lt.s32.totalorder %s15, 1
      %s158 = scalar_select %p157, %s15, 1
      %s159 = smul.addr %s158, 8
      %s160 = scalar_lea.vmem %s2, %s159
      %p161 = pneg %p109
      %p162 = pneg %p106
      %p163 = scmp.lt.s32.totalorder %s15, 1
      %s164 = scalar_select %p163, %s15, 1
      %s165 = smul.addr %s164, 8
      %s166 = scalar_lea.vmem %s3, %s165
      %p167 = scmp.lt.s32.totalorder %s15, 1
      %s168 = scalar_select %p167, %s15, 1
      %s169 = smul.addr %s168, 3
      %s170 = smul.addr %s169, 8
      %s171 = scalar_lea.vmem %s0, %s170
      %p172 = scmp.lt.s32.totalorder %s15, 1
      %s173 = scalar_select %p172, %s15, 1
      %s174 = smul.addr %s173, 8
      %s175 = scalar_lea.vmem %s2, %s174
      %p176 = scmp.lt.s32.totalorder %s15, 1
      %s177 = scalar_select %p176, %s15, 1
      %s178 = smul.addr %s177, 8
      %s179 = scalar_lea.vmem %s3, %s178
      %s180 = scalar_lea.vmem %s171, 1
      %v181 = vld [vmem:[%s180] ss:$2 sm:$0xff]
      %v182 = vld [vmem:[%s1] sm:$0xff]
      %v183 = vld [vmem:[%s1 + $0x8] sm:$0xff]
      %v184 = vld [vmem:[%s1 + $0x10] sm:$0xff]
      %v185 = vld [vmem:[%s1 + $0x18] sm:$0xff]
      %v186 = vld [vmem:[%s1 + $0x20] sm:$0xff]
      %v187 = vld [vmem:[%s1 + $0x28] sm:$0xff]
      %v188 = vld [vmem:[%s1 + $0x30] sm:$0xff]
      %v189 = vld [vmem:[%s1 + $0x38] sm:$0xff]
      %v190 = vld [vmem:[%s1 + $0x40] sm:$0xff]
      %v191 = vld [vmem:[%s1 + $0x48] sm:$0xff]
      %v192 = vld [vmem:[%s1 + $0x50] sm:$0xff]
      %v193 = vld [vmem:[%s1 + $0x58] sm:$0xff]
      %v194 = vld [vmem:[%s1 + $0x60] sm:$0xff]
      %v195 = vld [vmem:[%s1 + $0x68] sm:$0xff]
      %v196 = vld [vmem:[%s1 + $0x70] sm:$0xff]
      %v197 = vld [vmem:[%s1 + $0x78] sm:$0xff]
      %198 = vmatprep.subr.mxu0 0.0
      %199 = vmatpush1.msra.mxu0 %v182
      %200 = vmatprep.subr.mxu0 0.0
      %201 = vmatpush1.msra.mxu0 %v183
      %202 = vmatprep.subr.mxu0 0.0
      %203 = vmatpush1.msra.mxu0 %v184
      %204 = vmatprep.subr.mxu0 0.0
      %205 = vmatpush1.msra.mxu0 %v185
      %206 = vmatprep.subr.mxu0 0.0
      %207 = vmatpush1.msra.mxu0 %v186
      %208 = vmatprep.subr.mxu0 0.0
      %209 = vmatpush1.msra.mxu0 %v187
      %210 = vmatprep.subr.mxu0 0.0
      %211 = vmatpush1.msra.mxu0 %v188
      %212 = vmatprep.subr.mxu0 0.0
      %213 = vmatpush1.msra.mxu0 %v189
      %214 = vmatprep.subr.mxu0 0.0
      %215 = vmatpush1.msra.mxu0 %v190
      %216 = vmatprep.subr.mxu0 0.0
      %217 = vmatpush1.msra.mxu0 %v191
      %218 = vmatprep.subr.mxu0 0.0
      %219 = vmatpush1.msra.mxu0 %v192
      %220 = vmatprep.subr.mxu0 0.0
      %221 = vmatpush1.msra.mxu0 %v193
      %222 = vmatprep.subr.mxu0 0.0
      %223 = vmatpush1.msra.mxu0 %v194
      %224 = vmatprep.subr.mxu0 0.0
      %225 = vmatpush1.msra.mxu0 %v195
      %226 = vmatprep.subr.mxu0 0.0
      %227 = vmatpush1.msra.mxu0 %v196
      %228 = vmatprep.subr.mxu0 0.0
      %229 = vmatpush1.msra.mxu0 %v197
      %230 = vmatprep.subr.mxu0 0.0
      %231 = vmatpush1.msra.mxu0 0.0
      %232 = vmatprep.subr.mxu0 0.0
      %233 = vmatpush1.msra.mxu0 0.0
      %234 = vmatprep.subr.mxu0 0.0
      %235 = vmatpush1.msra.mxu0 0.0
      %236 = vmatprep.subr.mxu0 0.0
      %237 = vmatpush1.msra.mxu0 0.0
      %238 = vmatprep.subr.mxu0 0.0
      %239 = vmatpush1.msra.mxu0 0.0
      %240 = vmatprep.subr.mxu0 0.0
      %241 = vmatpush1.msra.mxu0 0.0
      %242 = vmatprep.subr.mxu0 0.0
      %243 = vmatpush1.msra.mxu0 0.0
      %244 = vmatprep.subr.mxu0 0.0
      %245 = vmatpush1.msra.mxu0 0.0
      %246 = vmatprep.subr.mxu0 0.0
      %247 = vmatpush1.msra.mxu0 0.0
      %248 = vmatprep.subr.mxu0 0.0
      %249 = vmatpush1.msra.mxu0 0.0
      %250 = vmatprep.subr.mxu0 0.0
      %251 = vmatpush1.msra.mxu0 0.0
      %252 = vmatprep.subr.mxu0 0.0
      %253 = vmatpush1.msra.mxu0 0.0
      %254 = vmatprep.subr.mxu0 0.0
      %255 = vmatpush1.msra.mxu0 0.0
      %256 = vmatprep.subr.mxu0 0.0
      %257 = vmatpush1.msra.mxu0 0.0
      %258 = vmatprep.subr.mxu0 0.0
      %259 = vmatpush1.msra.mxu0 0.0
      %260 = vmatprep.subr.mxu0 0.0
      %261 = vmatpush1.msra.mxu0 0.0
      %262 = vmatprep.mubr.f32.mxu0 0.0
      %263 = vmatmul.mubr.f32.gmra.mrb[0].mxu0 %v181
      %v264 = vpop.f32.mrb[0].mxu0
      %v265 = vadd.f32 0.0, %v264
      %v266 = vpop.f32.mrb[0].mxu0
      %267 = vdwg.mxu0
      %268 = vst [vmem:[%s175] sm:$0xff] %v265
      %v269 = vrot.slane %v265, 4
      %v270 = vadd.f32 %v265, %v269
      %v271 = vrot.slane %v270, 2
      %v272 = vadd.f32 %v270, %v271
      %v273 = vrot.slane %v272, 1
      %v274 = vadd.f32 %v272, %v273
      %v275 = vmul.f32 %v265, %v265
      %v276 = vrot.slane %v275, 4
      %v277 = vadd.f32 %v275, %v276
      %v278 = vrot.slane %v277, 2
      %v279 = vadd.f32 %v277, %v278
      %v280 = vrot.slane %v279, 1
      %v281 = vadd.f32 %v279, %v280
      %vm282 = vcmask 1040384
      %v283 = vsel %vm282, %v274, %v281
      %vm284 = vcmask 1041408
      %v285 = vsel %vm284, %v283, 0.0
      %286 = vst [vmem:[%s179] sm:$0xff] %v285
      %p287 = scmp.lt.s32.totalorder %s15, 1
      %s288 = scalar_select %p287, %s15, 1
      %s289 = smul.addr %s288, 8
      %s290 = scalar_lea.vmem %s2, %s289
      %p291 = scmp.lt.s32.totalorder %s15, 1
      %s292 = scalar_select %p291, %s15, 1
      %s293 = smul.addr %s292, 8
      %s294 = scalar_lea.vmem %s3, %s293
      // Predicated region
      $region29: #{residual_block_1d.6} parent=27 // pred_check
        %p295 = pneg %p80
      $region30: #{residual_block_1d.6} parent=27 // pred_check_branch
        %297 = sbr.rel (%p295) target = $region32
      $region31: #{residual_block_1d.6} parent=27 // pred_region
        _
      $region32: #{residual_block_1d.6} parent=27 // pred_fallthru
        _
      // Predicated region
      $region33: #{residual_block_1d.6} parent=27 // pred_check
        %p298 = pneg %p106
      $region34: #{residual_block_1d.6} parent=27 // pred_check_branch
        %300 = sbr.rel (%p298) target = $region36
      $region35: #{residual_block_1d.6} parent=27 // pred_region
        _
      $region36: #{residual_block_1d.6} parent=27 // pred_fallthru
        _
    $region28: #{residual_block_1d.6} parent=5 // pred_fallthru
      _
    %p301 = scmp.le.s32.totalorder 2, %s10
    // Predicated region
    $region37: #{residual_block_1d.6} parent=5 // pred_check
      %p302 = pneg %p301
    $region38: #{residual_block_1d.6} parent=5 // pred_check_branch
      %304 = sbr.rel (%p302) target = $region40
    $region39: #{residual_block_1d.6} parent=5 // pred_region
      %s305 = ssub.s32 %s10, 2
      // Predicated region
      $region41: #{residual_block_1d.6} parent=39 // pred_check
        %p306 = pneg %p86
      $region42: #{residual_block_1d.6} parent=39 // pred_check_branch
        %308 = sbr.rel (%p306) target = $region44
      $region43: #{residual_block_1d.6} parent=39 // pred_region
        %p309 = scmp.lt.s32.totalorder %s16, 1
        %s310 = scalar_select %p309, %s16, 1
        %s311 = smul.addr %s310, 8
        %s312 = scalar_lea.vmem %s2, %s311
      $region44: #{residual_block_1d.6} parent=39 // pred_fallthru
        _
      // Predicated region
      $region45: #{residual_block_1d.6} parent=39 // pred_check
        %p313 = pneg %p112
      $region46: #{residual_block_1d.6} parent=39 // pred_check_branch
        %315 = sbr.rel (%p313) target = $region48
      $region47: #{residual_block_1d.6} parent=39 // pred_region
        %p316 = scmp.lt.s32.totalorder %s16, 1
        %s317 = scalar_select %p316, %s16, 1
        %s318 = smul.addr %s317, 8
        %s319 = scalar_lea.vmem %s3, %s318
      $region48: #{residual_block_1d.6} parent=39 // pred_fallthru
        _
    $region40: #{residual_block_1d.6} parent=5 // pred_fallthru
      _
  $region6: #{residual_block_1d.6} parent=0 // loop_footer
    %s14 = sadd.s32 1, %s10
  $region7: #{residual_block_1d.6} parent=0 // loop_footer_branch
    %9 = sbr.rel target = $region3
  $region8: #{residual_block_1d.6} parent=0 // loop_exit
    _

</llo_original>
